<compile_context>
chip_gen: v7x
topology: tpu7x:2x2x1
jax: 0.10.0
libtpu: 0.0.40
codegen_flags: <defaults>
</compile_context>

<pallas_src>
import functools

import jax
import jax.numpy as jnp
from jax.experimental import pallas as pl
from jax.experimental.pallas import tpu as pltpu


def dynconv_edge_kernel(x_ref, wd_ref, w2_ref, scale_ref, shift_ref, out_ref,
                        *, k, dilation, n):
    """One graph per grid step: dilated KNN + EdgeConv(max) + BN(eval) + ReLU."""
    x = x_ref[...]                                         # (N, Cin), native dtype
    scale = scale_ref[...].astype(jnp.float32)             # (1, Cout)
    shift = shift_ref[...].astype(jnp.float32)             # (1, Cout), bias folded in

    # ---- pairwise (row-relative) squared distances on the MXU ----
    gram = jnp.einsum("id,jd->ij", x, x,
                      preferred_element_type=jnp.float32)  # (N, N)  x_i . x_j
    row_ids = jax.lax.broadcasted_iota(jnp.int32, (n, n), 0)
    col_ids = jax.lax.broadcasted_iota(jnp.int32, (n, n), 1)
    # ||x_j||^2 as a lane vector = diagonal of the gram matrix (sublane reduce).
    sq_j = jnp.sum(jnp.where(row_ids == col_ids, gram, 0.0),
                   axis=0, keepdims=True)                  # (1, N)
    # D'[i,j] = ||x_j||^2 - 2 x_i.x_j  (same per-row ordering as the true distance)
    dist = sq_j - 2.0 * gram                               # (N, N)

    # ---- per-edge Linear split: [x_i, x_j - x_i] @ W = x_i@(W1-W2) + x_j@W2 ----
    p = jnp.dot(x, wd_ref[...], preferred_element_type=jnp.float32)   # (N, Cout)
    q = jnp.dot(x, w2_ref[...], preferred_element_type=jnp.float32)   # (N, Cout)

    col_f = col_ids.astype(jnp.float32)
    big = jnp.float32(1e30)
    out = jnp.zeros_like(p)        # messages are post-ReLU (>= 0): 0 is the max identity

    # Dilated KNN (stochastic=False): iteratively extract nearest-neighbour ranks
    # 0 .. k*dilation-1 (rank 0 == self) and keep every `dilation`-th rank.
    for r in range(k * dilation):
        row_min = jnp.min(dist, axis=1, keepdims=True)                 # (N, 1)
        at_min = dist <= row_min
        idx = jnp.min(jnp.where(at_min, col_f, big),                   # lowest-index tie-break
                      axis=1, keepdims=True)                           # (N, 1)
        sel = col_f == idx                                             # exact one-hot (N, N)
        if r % dilation == 0:
            # Neighbour gather as a one-hot matmul on the MXU.
            qn = jnp.dot(sel.astype(jnp.float32), q,
                         preferred_element_type=jnp.float32)           # (N, Cout) = q[nbr]
            msg = jnp.maximum(scale * (p + qn) + shift, 0.0)           # BN(eval) + ReLU
            out = jnp.maximum(out, msg)                                # 'max' aggregation
        if r + 1 < k * dilation:
            dist = jnp.where(sel, big, dist)                           # remove this rank

    out_ref[...] = out.astype(out_ref.dtype)


def dynconv_forward(x, batch, weight, bias, bn_gamma, bn_beta, bn_mean, bn_var,
                    *, num_graphs, k, dilation, eps=1e-5, edge_index=None):
    """DynConv forward (gcn_type='edge', aggr='max', eval-mode BatchNorm1d).

    x:      (M, Cin) node features, M = num_graphs * N with contiguous equal-size
            graphs (the layout the dense 'matrix' KNN path operates on).
    batch:  (M,) graph id per node (implied by the contiguous layout; unused).
    weight: (2*Cin, Cout) EdgeConv MLP weight; bias: (Cout,).
    """
    M, Cin = x.shape
    Cout = weight.shape[1]
    assert weight.shape[0] == 2 * Cin
    assert M % num_graphs == 0
    N = M // num_graphs
    assert N % 8 == 0, "per-graph node count must be a multiple of 8 (sublane tiling)"
    assert k * dilation <= N
    del batch        # layout (contiguous equal-size graphs) implies the graph ids
    del edge_index   # TODO(synk): opt.mixedge=True (torch.unique merge of static+dyn edges) not implemented
    # TODO(synk): stochastic dilation (opt.stochastic/epsilon) and training-mode BN
    # batch statistics are not replicated; eval-mode running stats are used.

    # Host-side folding: BN affine + Linear bias -> one scale/shift epilogue,
    # and W split so the per-edge Linear becomes x_i@(W1-W2) + x_j@W2.
    scale = bn_gamma / jnp.sqrt(bn_var + eps)
    shift = bn_beta - bn_mean * scale + bias * scale
    wd = weight[:Cin] - weight[Cin:]          # coefficient of x_i
    w2 = weight[Cin:]                         # coefficient of x_j

    kernel = functools.partial(dynconv_edge_kernel, k=k, dilation=dilation, n=N)

    flops = num_graphs * (2 * N * N * Cin            # pairwise distances
                          + 2 * 2 * N * Cin * Cout   # P and Q
                          + 2 * k * N * N * Cout)    # one-hot neighbour gathers
    bytes_accessed = (x.size + 2 * wd.size + 2 * Cout + M * Cout) * 4

    return pl.pallas_call(
        kernel,
        out_shape=jax.ShapeDtypeStruct((M, Cout), x.dtype),
        grid=(num_graphs,),
        in_specs=[
            pl.BlockSpec((N, Cin), lambda b: (b, 0)),       # per-graph node block
            pl.BlockSpec((Cin, Cout), lambda b: (0, 0)),    # W1 - W2 (resident)
            pl.BlockSpec((Cin, Cout), lambda b: (0, 0)),    # W2      (resident)
            pl.BlockSpec((1, Cout), lambda b: (0, 0)),      # BN scale
            pl.BlockSpec((1, Cout), lambda b: (0, 0)),      # BN shift (+ folded bias)
        ],
        out_specs=pl.BlockSpec((N, Cout), lambda b: (b, 0)),
        compiler_params=pltpu.CompilerParams(
            dimension_semantics=("parallel",),              # graphs independent -> megacore / v7x 2 TCs
            vmem_limit_bytes=32 * 1024 * 1024),
        cost_estimate=pl.CostEstimate(flops=flops, transcendentals=0,
                                      bytes_accessed=bytes_accessed),
    )(x, wd, w2, scale.reshape(1, Cout), shift.reshape(1, Cout))


def reference_forward(x, batch, weight, bias, bn_gamma, bn_beta, bn_mean, bn_var,
                      *, num_graphs, k, dilation, eps=1e-5):
    """Pure-JAX DynConv reference (dense matrix KNN + EdgeConv / max aggregation)."""
    M, Cin = x.shape
    N = M // num_graphs
    hp = jax.lax.Precision.HIGHEST
    xb = x.reshape(num_graphs, N, Cin)
    outs = []
    for g in range(num_graphs):
        xg = xb[g]
        sq = jnp.sum(xg * xg, axis=1)
        d2 = sq[:, None] + sq[None, :] - 2.0 * jnp.dot(xg, xg.T, precision=hp)
        _, idx = jax.lax.top_k(-d2, k * dilation)      # nearest (incl. self) first
        idx = idx[:, ::dilation]                       # dilated ranks 0, d, 2d, ...
        xi = jnp.broadcast_to(xg[:, None, :], (N, k, Cin))
        xj = xg[idx]                                   # (N, k, Cin)
        feat = jnp.concatenate([xi, xj - xi], axis=-1).reshape(N * k, 2 * Cin)
        z = jnp.dot(feat, weight, precision=hp) + bias
        z = (z - bn_mean) / jnp.sqrt(bn_var + eps) * bn_gamma + bn_beta
        z = jnp.maximum(z, 0.0).reshape(N, k, -1)
        outs.append(jnp.max(z, axis=1))
    return jnp.concatenate(outs, axis=0)


if __name__ == "__main__":
    key = jax.random.PRNGKey(0)
    k_x, k_w, k_b, k_g, k_bt, k_m, k_v = jax.random.split(key, 7)

    B, N = 2, 64                   # 2 graphs, 64 nodes each
    Cin, Cout = 16, 128            # Cout multiple of 128 -> lane-dense stores
    kk, dilation = 4, 2            # opt.kernel_size = 4, dilation = 2
    M = B * N

    x = jax.random.normal(k_x, (M, Cin), dtype=jnp.float32)
    batch = jnp.repeat(jnp.arange(B, dtype=jnp.int32), N)

    weight = jax.random.normal(k_w, (2 * Cin, Cout), dtype=jnp.float32) * 0.1
    bias = jax.random.normal(k_b, (Cout,), dtype=jnp.float32) * 0.1
    bn_gamma = 1.0 + 0.1 * jax.random.normal(k_g, (Cout,), dtype=jnp.float32)
    bn_beta = 0.1 * jax.random.normal(k_bt, (Cout,), dtype=jnp.float32)
    bn_mean = 0.1 * jax.random.normal(k_m, (Cout,), dtype=jnp.float32)
    bn_var = jnp.abs(jax.random.normal(k_v, (Cout,), dtype=jnp.float32)) + 0.5

    out = dynconv_forward(x, batch, weight, bias, bn_gamma, bn_beta, bn_mean, bn_var,
                          num_graphs=B, k=kk, dilation=dilation)
    out = jax.block_until_ready(out)

    ref = reference_forward(x, batch, weight, bias, bn_gamma, bn_beta, bn_mean, bn_var,
                            num_graphs=B, k=kk, dilation=dilation)
    assert out.shape == (M, Cout)
    err = float(jnp.max(jnp.abs(out - ref)))
    assert jnp.allclose(out, ref, atol=5e-3, rtol=5e-3), f"mismatch vs reference, max abs err {err:e}"
    print("KERNEL_OK")
</pallas_src>

<mosaic_0001>
module attributes {stable_mosaic.version = 11 : i64} {
  func.func @dynconv_edge_kernel(%arg0: i32, %arg1: memref<64x16xf32, #tpu.memory_space<vmem>>, %arg2: memref<16x128xf32, #tpu.memory_space<vmem>>, %arg3: memref<16x128xf32, #tpu.memory_space<vmem>>, %arg4: memref<1x128xf32, #tpu.memory_space<vmem>>, %arg5: memref<1x128xf32, #tpu.memory_space<vmem>>, %arg6: memref<64x128xf32, #tpu.memory_space<vmem>>) attributes {dimension_semantics = [#tpu.dimension_semantics<parallel>], iteration_bounds = array<i64: 2>, scalar_prefetch = 0 : i64, scratch_operands = 0 : i64, tpu.core_type = #tpu.core_type<tc>, window_params = [{transform_indices = @transform_0, window_bounds = array<i64: 64, 16>}, {pipeline_mode = #tpu.pipeline_mode<synchronous>, transform_indices = @transform_1, window_bounds = array<i64: 16, 128>}, {pipeline_mode = #tpu.pipeline_mode<synchronous>, transform_indices = @transform_2, window_bounds = array<i64: 16, 128>}, {pipeline_mode = #tpu.pipeline_mode<synchronous>, transform_indices = @transform_3, window_bounds = array<i64: 1, 128>}, {pipeline_mode = #tpu.pipeline_mode<synchronous>, transform_indices = @transform_4, window_bounds = array<i64: 1, 128>}, {transform_indices = @transform_5, window_bounds = array<i64: 64, 128>}]} {
    %c0 = arith.constant 0 : index
    %c0_0 = arith.constant 0 : index
    %0 = vector.load %arg1[%c0, %c0_0] : memref<64x16xf32, #tpu.memory_space<vmem>>, vector<64x16xf32>
    %c0_1 = arith.constant 0 : index
    %c0_2 = arith.constant 0 : index
    %1 = vector.load %arg4[%c0_1, %c0_2] : memref<1x128xf32, #tpu.memory_space<vmem>>, vector<1x128xf32>
    %c0_3 = arith.constant 0 : index
    %c0_4 = arith.constant 0 : index
    %2 = vector.load %arg5[%c0_3, %c0_4] : memref<1x128xf32, #tpu.memory_space<vmem>>, vector<1x128xf32>
    "tpu.trace_start"() <{level = 10 : i32, message = "id,jd->ij"}> : () -> ()
    %cst = arith.constant dense<0.000000e+00> : vector<64x64xf32>
    %3 = tpu.matmul %0, %0, %cst {dimension_numbers = #tpu.dot_dimension_numbers<[1], [1], [0], [0], [0, 0, 1, 0], [], []>} : vector<64x16xf32>, vector<64x16xf32>, vector<64x64xf32> -> vector<64x64xf32>
    "tpu.trace_stop"() : () -> ()
    %4 = tpu.iota {dimensions = array<i32: 0>} : vector<64x64xi32>
    %5 = tpu.iota {dimensions = array<i32: 1>} : vector<64x64xi32>
    %6 = arith.cmpi eq, %4, %5 : vector<64x64xi32>
    %cst_5 = arith.constant 0.000000e+00 : f32
    %7 = vector.broadcast %cst_5 : f32 to vector<64x64xf32>
    %8 = arith.select %6, %3, %7 : vector<64x64xi1>, vector<64x64xf32>
    %cst_6 = arith.constant dense<0.000000e+00> : vector<64xf32>
    %9 = vector.multi_reduction <add>, %8, %cst_6 [0] : vector<64x64xf32> to vector<64xf32>
    %10 = vector.shape_cast %9 : vector<64xf32> to vector<1x64xf32>
    %cst_7 = arith.constant 2.000000e+00 : f32
    %11 = vector.broadcast %cst_7 : f32 to vector<64x64xf32>
    %12 = arith.mulf %11, %3 : vector<64x64xf32>
    %13 = vector.broadcast %10 : vector<1x64xf32> to vector<64x64xf32>
    %14 = arith.subf %13, %12 : vector<64x64xf32>
    %c0_8 = arith.constant 0 : index
    %c0_9 = arith.constant 0 : index
    %15 = vector.load %arg2[%c0_8, %c0_9] : memref<16x128xf32, #tpu.memory_space<vmem>>, vector<16x128xf32>
    %cst_10 = arith.constant dense<0.000000e+00> : vector<64x128xf32>
    %16 = tpu.matmul %0, %15, %cst_10 {dimension_numbers = #tpu.dot_dimension_numbers<[1], [0], [0], [1], [0, 0, 1, 1], [], []>} : vector<64x16xf32>, vector<16x128xf32>, vector<64x128xf32> -> vector<64x128xf32>
    %c0_11 = arith.constant 0 : index
    %c0_12 = arith.constant 0 : index
    %17 = vector.load %arg3[%c0_11, %c0_12] : memref<16x128xf32, #tpu.memory_space<vmem>>, vector<16x128xf32>
    %cst_13 = arith.constant dense<0.000000e+00> : vector<64x128xf32>
    %18 = tpu.matmul %0, %17, %cst_13 {dimension_numbers = #tpu.dot_dimension_numbers<[1], [0], [0], [1], [0, 0, 1, 1], [], []>} : vector<64x16xf32>, vector<16x128xf32>, vector<64x128xf32> -> vector<64x128xf32>
    %19 = arith.sitofp %5 : vector<64x64xi32> to vector<64x64xf32>
    %cst_14 = arith.constant 0.000000e+00 : f32
    %20 = vector.broadcast %cst_14 : f32 to vector<64x128xf32>
    %cst_15 = arith.constant dense<0x7F800000> : vector<64xf32>
    %21 = vector.multi_reduction <minimumf>, %14, %cst_15 [1] : vector<64x64xf32> to vector<64xf32>
    %22 = vector.shape_cast %21 : vector<64xf32> to vector<64x1xf32>
    %23 = vector.broadcast %22 : vector<64x1xf32> to vector<64x64xf32>
    %24 = arith.cmpf ole, %14, %23 : vector<64x64xf32>
    %cst_16 = arith.constant 1.000000e+30 : f32
    %25 = vector.broadcast %cst_16 : f32 to vector<64x64xf32>
    %26 = arith.select %24, %19, %25 : vector<64x64xi1>, vector<64x64xf32>
    %cst_17 = arith.constant dense<0x7F800000> : vector<64xf32>
    %27 = vector.multi_reduction <minimumf>, %26, %cst_17 [1] : vector<64x64xf32> to vector<64xf32>
    %28 = vector.shape_cast %27 : vector<64xf32> to vector<64x1xf32>
    %29 = vector.broadcast %28 : vector<64x1xf32> to vector<64x64xf32>
    %30 = arith.cmpf oeq, %19, %29 : vector<64x64xf32>
    %31 = arith.extui %30 : vector<64x64xi1> to vector<64x64xi32>
    %32 = arith.sitofp %31 : vector<64x64xi32> to vector<64x64xf32>
    %cst_18 = arith.constant dense<0.000000e+00> : vector<64x128xf32>
    %33 = tpu.matmul %32, %18, %cst_18 {dimension_numbers = #tpu.dot_dimension_numbers<[1], [0], [0], [1], [0, 0, 1, 1], [], []>} : vector<64x64xf32>, vector<64x128xf32>, vector<64x128xf32> -> vector<64x128xf32>
    %34 = arith.addf %16, %33 : vector<64x128xf32>
    %35 = vector.broadcast %1 : vector<1x128xf32> to vector<64x128xf32>
    %36 = arith.mulf %35, %34 : vector<64x128xf32>
    %37 = vector.broadcast %2 : vector<1x128xf32> to vector<64x128xf32>
    %38 = arith.addf %36, %37 : vector<64x128xf32>
    %cst_19 = arith.constant 0.000000e+00 : f32
    %39 = vector.broadcast %cst_19 : f32 to vector<64x128xf32>
    %40 = arith.maximumf %38, %39 : vector<64x128xf32>
    %41 = arith.maximumf %20, %40 : vector<64x128xf32>
    %cst_20 = arith.constant 1.000000e+30 : f32
    %42 = vector.broadcast %cst_20 : f32 to vector<64x64xf32>
    %43 = arith.select %30, %42, %14 : vector<64x64xi1>, vector<64x64xf32>
    %cst_21 = arith.constant dense<0x7F800000> : vector<64xf32>
    %44 = vector.multi_reduction <minimumf>, %43, %cst_21 [1] : vector<64x64xf32> to vector<64xf32>
    %45 = vector.shape_cast %44 : vector<64xf32> to vector<64x1xf32>
    %46 = vector.broadcast %45 : vector<64x1xf32> to vector<64x64xf32>
    %47 = arith.cmpf ole, %43, %46 : vector<64x64xf32>
    %cst_22 = arith.constant 1.000000e+30 : f32
    %48 = vector.broadcast %cst_22 : f32 to vector<64x64xf32>
    %49 = arith.select %47, %19, %48 : vector<64x64xi1>, vector<64x64xf32>
    %cst_23 = arith.constant dense<0x7F800000> : vector<64xf32>
    %50 = vector.multi_reduction <minimumf>, %49, %cst_23 [1] : vector<64x64xf32> to vector<64xf32>
    %51 = vector.shape_cast %50 : vector<64xf32> to vector<64x1xf32>
    %52 = vector.broadcast %51 : vector<64x1xf32> to vector<64x64xf32>
    %53 = arith.cmpf oeq, %19, %52 : vector<64x64xf32>
    %cst_24 = arith.constant 1.000000e+30 : f32
    %54 = vector.broadcast %cst_24 : f32 to vector<64x64xf32>
    %55 = arith.select %53, %54, %43 : vector<64x64xi1>, vector<64x64xf32>
    %cst_25 = arith.constant dense<0x7F800000> : vector<64xf32>
    %56 = vector.multi_reduction <minimumf>, %55, %cst_25 [1] : vector<64x64xf32> to vector<64xf32>
    %57 = vector.shape_cast %56 : vector<64xf32> to vector<64x1xf32>
    %58 = vector.broadcast %57 : vector<64x1xf32> to vector<64x64xf32>
    %59 = arith.cmpf ole, %55, %58 : vector<64x64xf32>
    %cst_26 = arith.constant 1.000000e+30 : f32
    %60 = vector.broadcast %cst_26 : f32 to vector<64x64xf32>
    %61 = arith.select %59, %19, %60 : vector<64x64xi1>, vector<64x64xf32>
    %cst_27 = arith.constant dense<0x7F800000> : vector<64xf32>
    %62 = vector.multi_reduction <minimumf>, %61, %cst_27 [1] : vector<64x64xf32> to vector<64xf32>
    %63 = vector.shape_cast %62 : vector<64xf32> to vector<64x1xf32>
    %64 = vector.broadcast %63 : vector<64x1xf32> to vector<64x64xf32>
    %65 = arith.cmpf oeq, %19, %64 : vector<64x64xf32>
    %66 = arith.extui %65 : vector<64x64xi1> to vector<64x64xi32>
    %67 = arith.sitofp %66 : vector<64x64xi32> to vector<64x64xf32>
    %cst_28 = arith.constant dense<0.000000e+00> : vector<64x128xf32>
    %68 = tpu.matmul %67, %18, %cst_28 {dimension_numbers = #tpu.dot_dimension_numbers<[1], [0], [0], [1], [0, 0, 1, 1], [], []>} : vector<64x64xf32>, vector<64x128xf32>, vector<64x128xf32> -> vector<64x128xf32>
    %69 = arith.addf %16, %68 : vector<64x128xf32>
    %70 = vector.broadcast %1 : vector<1x128xf32> to vector<64x128xf32>
    %71 = arith.mulf %70, %69 : vector<64x128xf32>
    %72 = vector.broadcast %2 : vector<1x128xf32> to vector<64x128xf32>
    %73 = arith.addf %71, %72 : vector<64x128xf32>
    %cst_29 = arith.constant 0.000000e+00 : f32
    %74 = vector.broadcast %cst_29 : f32 to vector<64x128xf32>
    %75 = arith.maximumf %73, %74 : vector<64x128xf32>
    %76 = arith.maximumf %41, %75 : vector<64x128xf32>
    %cst_30 = arith.constant 1.000000e+30 : f32
    %77 = vector.broadcast %cst_30 : f32 to vector<64x64xf32>
    %78 = arith.select %65, %77, %55 : vector<64x64xi1>, vector<64x64xf32>
    %cst_31 = arith.constant dense<0x7F800000> : vector<64xf32>
    %79 = vector.multi_reduction <minimumf>, %78, %cst_31 [1] : vector<64x64xf32> to vector<64xf32>
    %80 = vector.shape_cast %79 : vector<64xf32> to vector<64x1xf32>
    %81 = vector.broadcast %80 : vector<64x1xf32> to vector<64x64xf32>
    %82 = arith.cmpf ole, %78, %81 : vector<64x64xf32>
    %cst_32 = arith.constant 1.000000e+30 : f32
    %83 = vector.broadcast %cst_32 : f32 to vector<64x64xf32>
    %84 = arith.select %82, %19, %83 : vector<64x64xi1>, vector<64x64xf32>
    %cst_33 = arith.constant dense<0x7F800000> : vector<64xf32>
    %85 = vector.multi_reduction <minimumf>, %84, %cst_33 [1] : vector<64x64xf32> to vector<64xf32>
    %86 = vector.shape_cast %85 : vector<64xf32> to vector<64x1xf32>
    %87 = vector.broadcast %86 : vector<64x1xf32> to vector<64x64xf32>
    %88 = arith.cmpf oeq, %19, %87 : vector<64x64xf32>
    %cst_34 = arith.constant 1.000000e+30 : f32
    %89 = vector.broadcast %cst_34 : f32 to vector<64x64xf32>
    %90 = arith.select %88, %89, %78 : vector<64x64xi1>, vector<64x64xf32>
    %cst_35 = arith.constant dense<0x7F800000> : vector<64xf32>
    %91 = vector.multi_reduction <minimumf>, %90, %cst_35 [1] : vector<64x64xf32> to vector<64xf32>
    %92 = vector.shape_cast %91 : vector<64xf32> to vector<64x1xf32>
    %93 = vector.broadcast %92 : vector<64x1xf32> to vector<64x64xf32>
    %94 = arith.cmpf ole, %90, %93 : vector<64x64xf32>
    %cst_36 = arith.constant 1.000000e+30 : f32
    %95 = vector.broadcast %cst_36 : f32 to vector<64x64xf32>
    %96 = arith.select %94, %19, %95 : vector<64x64xi1>, vector<64x64xf32>
    %cst_37 = arith.constant dense<0x7F800000> : vector<64xf32>
    %97 = vector.multi_reduction <minimumf>, %96, %cst_37 [1] : vector<64x64xf32> to vector<64xf32>
    %98 = vector.shape_cast %97 : vector<64xf32> to vector<64x1xf32>
    %99 = vector.broadcast %98 : vector<64x1xf32> to vector<64x64xf32>
    %100 = arith.cmpf oeq, %19, %99 : vector<64x64xf32>
    %101 = arith.extui %100 : vector<64x64xi1> to vector<64x64xi32>
    %102 = arith.sitofp %101 : vector<64x64xi32> to vector<64x64xf32>
    %cst_38 = arith.constant dense<0.000000e+00> : vector<64x128xf32>
    %103 = tpu.matmul %102, %18, %cst_38 {dimension_numbers = #tpu.dot_dimension_numbers<[1], [0], [0], [1], [0, 0, 1, 1], [], []>} : vector<64x64xf32>, vector<64x128xf32>, vector<64x128xf32> -> vector<64x128xf32>
    %104 = arith.addf %16, %103 : vector<64x128xf32>
    %105 = vector.broadcast %1 : vector<1x128xf32> to vector<64x128xf32>
    %106 = arith.mulf %105, %104 : vector<64x128xf32>
    %107 = vector.broadcast %2 : vector<1x128xf32> to vector<64x128xf32>
    %108 = arith.addf %106, %107 : vector<64x128xf32>
    %cst_39 = arith.constant 0.000000e+00 : f32
    %109 = vector.broadcast %cst_39 : f32 to vector<64x128xf32>
    %110 = arith.maximumf %108, %109 : vector<64x128xf32>
    %111 = arith.maximumf %76, %110 : vector<64x128xf32>
    %cst_40 = arith.constant 1.000000e+30 : f32
    %112 = vector.broadcast %cst_40 : f32 to vector<64x64xf32>
    %113 = arith.select %100, %112, %90 : vector<64x64xi1>, vector<64x64xf32>
    %cst_41 = arith.constant dense<0x7F800000> : vector<64xf32>
    %114 = vector.multi_reduction <minimumf>, %113, %cst_41 [1] : vector<64x64xf32> to vector<64xf32>
    %115 = vector.shape_cast %114 : vector<64xf32> to vector<64x1xf32>
    %116 = vector.broadcast %115 : vector<64x1xf32> to vector<64x64xf32>
    %117 = arith.cmpf ole, %113, %116 : vector<64x64xf32>
    %cst_42 = arith.constant 1.000000e+30 : f32
    %118 = vector.broadcast %cst_42 : f32 to vector<64x64xf32>
    %119 = arith.select %117, %19, %118 : vector<64x64xi1>, vector<64x64xf32>
    %cst_43 = arith.constant dense<0x7F800000> : vector<64xf32>
    %120 = vector.multi_reduction <minimumf>, %119, %cst_43 [1] : vector<64x64xf32> to vector<64xf32>
    %121 = vector.shape_cast %120 : vector<64xf32> to vector<64x1xf32>
    %122 = vector.broadcast %121 : vector<64x1xf32> to vector<64x64xf32>
    %123 = arith.cmpf oeq, %19, %122 : vector<64x64xf32>
    %cst_44 = arith.constant 1.000000e+30 : f32
    %124 = vector.broadcast %cst_44 : f32 to vector<64x64xf32>
    %125 = arith.select %123, %124, %113 : vector<64x64xi1>, vector<64x64xf32>
    %cst_45 = arith.constant dense<0x7F800000> : vector<64xf32>
    %126 = vector.multi_reduction <minimumf>, %125, %cst_45 [1] : vector<64x64xf32> to vector<64xf32>
    %127 = vector.shape_cast %126 : vector<64xf32> to vector<64x1xf32>
    %128 = vector.broadcast %127 : vector<64x1xf32> to vector<64x64xf32>
    %129 = arith.cmpf ole, %125, %128 : vector<64x64xf32>
    %cst_46 = arith.constant 1.000000e+30 : f32
    %130 = vector.broadcast %cst_46 : f32 to vector<64x64xf32>
    %131 = arith.select %129, %19, %130 : vector<64x64xi1>, vector<64x64xf32>
    %cst_47 = arith.constant dense<0x7F800000> : vector<64xf32>
    %132 = vector.multi_reduction <minimumf>, %131, %cst_47 [1] : vector<64x64xf32> to vector<64xf32>
    %133 = vector.shape_cast %132 : vector<64xf32> to vector<64x1xf32>
    %134 = vector.broadcast %133 : vector<64x1xf32> to vector<64x64xf32>
    %135 = arith.cmpf oeq, %19, %134 : vector<64x64xf32>
    %136 = arith.extui %135 : vector<64x64xi1> to vector<64x64xi32>
    %137 = arith.sitofp %136 : vector<64x64xi32> to vector<64x64xf32>
    %cst_48 = arith.constant dense<0.000000e+00> : vector<64x128xf32>
    %138 = tpu.matmul %137, %18, %cst_48 {dimension_numbers = #tpu.dot_dimension_numbers<[1], [0], [0], [1], [0, 0, 1, 1], [], []>} : vector<64x64xf32>, vector<64x128xf32>, vector<64x128xf32> -> vector<64x128xf32>
    %139 = arith.addf %16, %138 : vector<64x128xf32>
    %140 = vector.broadcast %1 : vector<1x128xf32> to vector<64x128xf32>
    %141 = arith.mulf %140, %139 : vector<64x128xf32>
    %142 = vector.broadcast %2 : vector<1x128xf32> to vector<64x128xf32>
    %143 = arith.addf %141, %142 : vector<64x128xf32>
    %cst_49 = arith.constant 0.000000e+00 : f32
    %144 = vector.broadcast %cst_49 : f32 to vector<64x128xf32>
    %145 = arith.maximumf %143, %144 : vector<64x128xf32>
    %146 = arith.maximumf %111, %145 : vector<64x128xf32>
    %c0_50 = arith.constant 0 : index
    %c0_51 = arith.constant 0 : index
    %147 = vector.load %arg6[%c0_50, %c0_51] : memref<64x128xf32, #tpu.memory_space<vmem>>, vector<64x128xf32>
    tpu.vector_store %arg6[%c0_50, %c0_51], %146 {strides = array<i32>} : memref<64x128xf32, #tpu.memory_space<vmem>>, vector<64x128xf32>,
    return
  }
  func.func @transform_0(%arg0: i32) -> (i32, i32) {
    %c0_i32 = arith.constant 0 : i32
    %c0_i32_0 = arith.constant 0 : i32
    return %arg0, %c0_i32 : i32, i32
  }
  func.func @transform_1(%arg0: i32) -> (i32, i32) {
    %c0_i32 = arith.constant 0 : i32
    %c0_i32_0 = arith.constant 0 : i32
    %c0_i32_1 = arith.constant 0 : i32
    return %c0_i32, %c0_i32_0 : i32, i32
  }
  func.func @transform_2(%arg0: i32) -> (i32, i32) {
    %c0_i32 = arith.constant 0 : i32
    %c0_i32_0 = arith.constant 0 : i32
    %c0_i32_1 = arith.constant 0 : i32
    return %c0_i32, %c0_i32_0 : i32, i32
  }
  func.func @transform_3(%arg0: i32) -> (i32, i32) {
    %c0_i32 = arith.constant 0 : i32
    %c0_i32_0 = arith.constant 0 : i32
    %c0_i32_1 = arith.constant 0 : i32
    return %c0_i32, %c0_i32_0 : i32, i32
  }
  func.func @transform_4(%arg0: i32) -> (i32, i32) {
    %c0_i32 = arith.constant 0 : i32
    %c0_i32_0 = arith.constant 0 : i32
    %c0_i32_1 = arith.constant 0 : i32
    return %c0_i32, %c0_i32_0 : i32, i32
  }
  func.func @transform_5(%arg0: i32) -> (i32, i32) {
    %c0_i32 = arith.constant 0 : i32
    %c0_i32_0 = arith.constant 0 : i32
    return %arg0, %c0_i32 : i32, i32
  }
}

</mosaic_0001>

<llo_original>
// kernel: tpu_custom_call.1
$region0: #{tpu_custom_call.1}
  #allocation0 [shape = 'u32[]', space=smem, size = 0x4, offset = 0x4, fixed_abs, tag = 'smem constant byte address 0x4 - core index']
  #allocation1 [shape = 'u32[144,128]{1,0:T(1,128)}', space=vmem, size = 0x12000, scoped, tag = 'internal scratch']
  %s0 = inlined_call_operand.vmem [shape: f32[128,16], index: 0, kind: input, shape index: {}]
  %s1 = inlined_call_operand.vmem [shape: f32[16,128], index: 1, kind: input, shape index: {}]
  %s2 = inlined_call_operand.vmem [shape: f32[16,128], index: 2, kind: input, shape index: {}]
  %s3 = inlined_call_operand.vmem [shape: f32[1,128], index: 3, kind: input, shape index: {}]
  %s4 = inlined_call_operand.vmem [shape: f32[1,128], index: 4, kind: input, shape index: {}]
  %s5 = inlined_call_operand.hbm [shape: f32[128,128], index: 5, kind: output, shape index: {}]
  %s6 = sld [smem:[#allocation0]]
  $region53: #{tpu_custom_call.1} parent=0
    _
  %s8 = ssub.s32 1, %s6
  %s9 = scalar_select 0, %s8, %s6
  $region1: #{tpu_custom_call.1} parent=0
    #allocation2 [shape = 'u8[65536]{0}', space=vmem, size = 0x10000, scoped, tag = 'output window, operand 0']
    #allocation3 [shape = 's32[2]{0}', space=sflag, size = 0x8, scoped, tag = 'scoped memory for tpu_custom_call.1']
    %10 = vsyncpa [#allocation3], 0
    %s11 = scalar_lea.sflag [#allocation3], 1
    %12 = vsyncpa %s11, 0
    loop: start=0, step=1, limit=4
    $region2: #{tpu_custom_call.1} parent=1 // loop_pre_header
      _
    $region3: #{tpu_custom_call.1} parent=1 // loop_header
      %s14 = sphi 0, %s18
      %p15 = scmp.ge.s32.totalorder %s14, 4
      %s24 = sphi 0, %s26
      %s27 = sphi 0, %s24
      %s28 = sphi 0, %s27
      %s44 = sphi 0, %s28
      %s48 = sphi 0, %s48
      %s50 = sphi 0, %s48
      %s51 = sphi 0, %s50
      %s65 = sphi 0, %s51
      %s69 = sphi 0, %s69
      %s71 = sphi 0, %s69
      %s72 = sphi 0, %s71
      %s86 = sphi 0, %s72
      %s90 = sphi 0, %s90
      %s92 = sphi 0, %s90
      %s93 = sphi 0, %s92
      %s107 = sphi 0, %s93
      %s111 = sphi 0, %s111
      %s113 = sphi 0, %s111
      %s114 = sphi 0, %s113
      %s128 = sphi 0, %s114
      %s134 = sphi 0, %s136
      %s137 = sphi 0, %s134
      %s138 = sphi 0, %s137
      %s154 = sphi 0, %s138
    $region4: #{tpu_custom_call.1} parent=1 // loop_header_branch
      %17 = sbr.rel (%p15) target = $region8
    $region5: #{tpu_custom_call.1} parent=1 // loop_body
      %s19 = ssub.s32 %s14, 1
      %s20 = ssub.s32 %s14, 2
      %s21 = sadd.s32 %s14, 1
      %s22 = ssub.s32 %s14, %s21
      %p23 = scmp.eq.s32.totalorder %s22, 0
      %s25 = sadd.s32 %s24, 1
      %s26 = scalar_select %p23, %s24, %s25
      %p29 = pneg %p23
      %p30 = scmp.eq.s32.totalorder %s14, 1
      %p31 = por %p29, %p30
      %p32 = scmp.ne.s32.totalorder %s24, %s27
      %p33 = scmp.eq.s32.totalorder %s14, 0
      %p34 = por %p32, %p33
      %p35 = scmp.ne.s32.totalorder %s24, %s27
      %p36 = scmp.eq.s32.totalorder %s19, 1
      %p37 = por %p35, %p36
      %p38 = scmp.ne.s32.totalorder %s27, %s28
      %p39 = scmp.eq.s32.totalorder %s19, 0
      %p40 = por %p38, %p39
      %p41 = scmp.ne.s32.totalorder %s27, %s28
      %p42 = scmp.eq.s32.totalorder %s20, 1
      %p43 = por %p41, %p42
      %p45 = scmp.ne.s32.totalorder %s28, %s44
      %p46 = scmp.eq.s32.totalorder %s20, 0
      %p47 = por %p45, %p46
      %s49 = sadd.s32 %s48, 1
      %p52 = scmp.eq.s32.totalorder %s14, 1
      %p53 = scmp.ne.s32.totalorder %s48, %s50
      %p54 = scmp.eq.s32.totalorder %s14, 0
      %p55 = por %p53, %p54
      %p56 = scmp.ne.s32.totalorder %s48, %s50
      %p57 = scmp.eq.s32.totalorder %s19, 1
      %p58 = por %p56, %p57
      %p59 = scmp.ne.s32.totalorder %s50, %s51
      %p60 = scmp.eq.s32.totalorder %s19, 0
      %p61 = por %p59, %p60
      %p62 = scmp.ne.s32.totalorder %s50, %s51
      %p63 = scmp.eq.s32.totalorder %s20, 1
      %p64 = por %p62, %p63
      %p66 = scmp.ne.s32.totalorder %s51, %s65
      %p67 = scmp.eq.s32.totalorder %s20, 0
      %p68 = por %p66, %p67
      %s70 = sadd.s32 %s69, 1
      %p73 = scmp.eq.s32.totalorder %s14, 1
      %p74 = scmp.ne.s32.totalorder %s69, %s71
      %p75 = scmp.eq.s32.totalorder %s14, 0
      %p76 = por %p74, %p75
      %p77 = scmp.ne.s32.totalorder %s69, %s71
      %p78 = scmp.eq.s32.totalorder %s19, 1
      %p79 = por %p77, %p78
      %p80 = scmp.ne.s32.totalorder %s71, %s72
      %p81 = scmp.eq.s32.totalorder %s19, 0
      %p82 = por %p80, %p81
      %p83 = scmp.ne.s32.totalorder %s71, %s72
      %p84 = scmp.eq.s32.totalorder %s20, 1
      %p85 = por %p83, %p84
      %p87 = scmp.ne.s32.totalorder %s72, %s86
      %p88 = scmp.eq.s32.totalorder %s20, 0
      %p89 = por %p87, %p88
      %s91 = sadd.s32 %s90, 1
      %p94 = scmp.eq.s32.totalorder %s14, 1
      %p95 = scmp.ne.s32.totalorder %s90, %s92
      %p96 = scmp.eq.s32.totalorder %s14, 0
      %p97 = por %p95, %p96
      %p98 = scmp.ne.s32.totalorder %s90, %s92
      %p99 = scmp.eq.s32.totalorder %s19, 1
      %p100 = por %p98, %p99
      %p101 = scmp.ne.s32.totalorder %s92, %s93
      %p102 = scmp.eq.s32.totalorder %s19, 0
      %p103 = por %p101, %p102
      %p104 = scmp.ne.s32.totalorder %s92, %s93
      %p105 = scmp.eq.s32.totalorder %s20, 1
      %p106 = por %p104, %p105
      %p108 = scmp.ne.s32.totalorder %s93, %s107
      %p109 = scmp.eq.s32.totalorder %s20, 0
      %p110 = por %p108, %p109
      %s112 = sadd.s32 %s111, 1
      %p115 = scmp.eq.s32.totalorder %s14, 1
      %p116 = scmp.ne.s32.totalorder %s111, %s113
      %p117 = scmp.eq.s32.totalorder %s14, 0
      %p118 = por %p116, %p117
      %p119 = scmp.ne.s32.totalorder %s111, %s113
      %p120 = scmp.eq.s32.totalorder %s19, 1
      %p121 = por %p119, %p120
      %p122 = scmp.ne.s32.totalorder %s113, %s114
      %p123 = scmp.eq.s32.totalorder %s19, 0
      %p124 = por %p122, %p123
      %p125 = scmp.ne.s32.totalorder %s113, %s114
      %p126 = scmp.eq.s32.totalorder %s20, 1
      %p127 = por %p125, %p126
      %p129 = scmp.ne.s32.totalorder %s114, %s128
      %p130 = scmp.eq.s32.totalorder %s20, 0
      %p131 = por %p129, %p130
      %s132 = ssub.s32 %s14, %s21
      %p133 = scmp.eq.s32.totalorder %s132, 0
      %s135 = sadd.s32 %s134, 1
      %s136 = scalar_select %p133, %s134, %s135
      %p139 = pneg %p133
      %p140 = scmp.eq.s32.totalorder %s14, 1
      %p141 = por %p139, %p140
      %p142 = scmp.ne.s32.totalorder %s134, %s137
      %p143 = scmp.eq.s32.totalorder %s14, 0
      %p144 = por %p142, %p143
      %p145 = scmp.ne.s32.totalorder %s134, %s137
      %p146 = scmp.eq.s32.totalorder %s19, 1
      %p147 = por %p145, %p146
      %p148 = scmp.ne.s32.totalorder %s137, %s138
      %p149 = scmp.eq.s32.totalorder %s19, 0
      %p150 = por %p148, %p149
      %p151 = scmp.ne.s32.totalorder %s137, %s138
      %p152 = scmp.eq.s32.totalorder %s20, 1
      %p153 = por %p151, %p152
      %p155 = scmp.ne.s32.totalorder %s138, %s154
      %p156 = scmp.eq.s32.totalorder %s20, 0
      %p157 = por %p155, %p156
      %p158 = scmp.le.s32.totalorder 1, %s14
      %p159 = scmp.lt.s32.totalorder %s14, 3
      %p160 = pnand %p158, %p159
      %p161 = pneg %p160
      // Predicated region
      $region9: #{tpu_custom_call.1} parent=5 // pred_check
        _
      $region10: #{tpu_custom_call.1} parent=5 // pred_check_branch
        %163 = sbr.rel (%p160) target = $region12
      $region11: #{tpu_custom_call.1} parent=5 // pred_region
        %s164 = ssub.s32 %s14, 1
        // Predicated region
        $region13: #{tpu_custom_call.1} parent=11 // pred_check
          %p165 = pneg %p61
        $region14: #{tpu_custom_call.1} parent=11 // pred_check_branch
          %167 = sbr.rel (%p165) target = $region16
        $region15: #{tpu_custom_call.1} parent=11 // pred_region
          _
        $region16: #{tpu_custom_call.1} parent=11 // pred_fallthru
          _
        // Predicated region
        $region17: #{tpu_custom_call.1} parent=11 // pred_check
          %p168 = pneg %p82
        $region18: #{tpu_custom_call.1} parent=11 // pred_check_branch
          %170 = sbr.rel (%p168) target = $region20
        $region19: #{tpu_custom_call.1} parent=11 // pred_region
          _
        $region20: #{tpu_custom_call.1} parent=11 // pred_fallthru
          _
        // Predicated region
        $region21: #{tpu_custom_call.1} parent=11 // pred_check
          %p171 = pneg %p103
        $region22: #{tpu_custom_call.1} parent=11 // pred_check_branch
          %173 = sbr.rel (%p171) target = $region24
        $region23: #{tpu_custom_call.1} parent=11 // pred_region
          _
        $region24: #{tpu_custom_call.1} parent=11 // pred_fallthru
          _
        // Predicated region
        $region25: #{tpu_custom_call.1} parent=11 // pred_check
          %p174 = pneg %p124
        $region26: #{tpu_custom_call.1} parent=11 // pred_check_branch
          %176 = sbr.rel (%p174) target = $region28
        $region27: #{tpu_custom_call.1} parent=11 // pred_region
          _
        $region28: #{tpu_custom_call.1} parent=11 // pred_fallthru
          _
      $region12: #{tpu_custom_call.1} parent=5 // pred_fallthru
        _
      %p177 = scmp.lt.s32.totalorder %s14, 2
      // Predicated region
      $region29: #{tpu_custom_call.1} parent=5 // pred_check
        %p178 = pneg %p177
      $region30: #{tpu_custom_call.1} parent=5 // pred_check_branch
        %180 = sbr.rel (%p178) target = $region32
      $region31: #{tpu_custom_call.1} parent=5 // pred_region
        // Predicated region
        $region33: #{tpu_custom_call.1} parent=31 // pred_check
          %p181 = pneg %p34
        $region34: #{tpu_custom_call.1} parent=31 // pred_check_branch
          %183 = sbr.rel (%p181) target = $region36
        $region35: #{tpu_custom_call.1} parent=31 // pred_region
          %s184 = smul.u32 8, %s14
          %p185 = scmp.lt.s32.totalorder %s184, 15
          %s186 = scalar_select %p185, %s184, 15
          %s187 = smul.addr %s186, 8
          %s188 = scalar_lea.vmem %s0, %s187
          %s189 = smul.u32 8, %s14
        $region36: #{tpu_custom_call.1} parent=31 // pred_fallthru
          _
      $region32: #{tpu_custom_call.1} parent=5 // pred_fallthru
        _
      %p190 = scmp.le.s32.totalorder 1, %s14
      %p191 = scmp.lt.s32.totalorder %s14, 3
      %p192 = pnand %p190, %p191
      %p193 = pneg %p192
      // Predicated region
      $region37: #{tpu_custom_call.1} parent=5 // pred_check
        _
      $region38: #{tpu_custom_call.1} parent=5 // pred_check_branch
        %195 = sbr.rel (%p192) target = $region40
      $region39: #{tpu_custom_call.1} parent=5 // pred_region
        %s196 = ssub.s32 %s14, 1
        %s197 = smul.u32 8, %s19
        %p198 = scmp.lt.s32.totalorder %s197, 15
        %s199 = scalar_select %p198, %s197, 15
        %s200 = smul.addr %s199, 8
        %s201 = scalar_lea.vmem %s0, %s200
        %p202 = pneg %p40
        %p203 = pneg %p37
        %p204 = pneg %p61
        %p205 = pneg %p58
        %p206 = pneg %p82
        %p207 = pneg %p79
        %p208 = pneg %p103
        %p209 = pneg %p100
        %p210 = pneg %p124
        %p211 = pneg %p121
        %p212 = pneg %p150
        %p213 = pneg %p147
        %s214 = sand.u32 %s137, 1
        %s215 = scalar_lea.sflag [#allocation3], %s214
        %s216 = sand.u32 %s137, 1
        %s217 = smul.addr %s216, 64
        %s218 = scalar_lea.vmem [#allocation2], %s217
        %s219 = smul.u32 8, %s19
        %p220 = scmp.lt.s32.totalorder %s219, 15
        %s221 = scalar_select %p220, %s219, 15
        %s222 = smul.addr %s221, 8
        %s223 = scalar_lea.vmem %s0, %s222
        %s224 = smul.u32 8, %s19
        %s225 = smul.u32 8, %s19
        %v226 = vld [vmem:[%s223] sm:$0xff]
        %v227 = vld [vmem:[%s223 + $0x8] sm:$0xff]
        %v228 = vld [vmem:[%s223 + $0x10] sm:$0xff]
        %v229 = vld [vmem:[%s223 + $0x18] sm:$0xff]
        %v230 = vld [vmem:[%s223 + $0x20] sm:$0xff]
        %v231 = vld [vmem:[%s223 + $0x28] sm:$0xff]
        %v232 = vld [vmem:[%s223 + $0x30] sm:$0xff]
        %v233 = vld [vmem:[%s223 + $0x38] sm:$0xff]
        %v234 = vld [vmem:[%s3] sm:$0x1]
        %v235 = vld [vmem:[%s4] sm:$0x1]
        %vm236 = vcmask 130048
        %v238 = vsel %vm236, %v226, 0
        %v241 = vsel %vm236, %v227, 0
        %v244 = vsel %vm236, %v228, 0
        %v247 = vsel %vm236, %v229, 0
        %v250 = vsel %vm236, %v230, 0
        %v253 = vsel %vm236, %v231, 0
        %v256 = vsel %vm236, %v232, 0
        %v259 = vsel %vm236, %v233, 0
        %261 = vmatprep.subr.mxu0 0.0
        %262 = vmatpush1.xpose.msra.mxu0 %v238
        %263 = vmatprep.subr.mxu0 0.0
        %264 = vmatpush1.xpose.msra.mxu0 %v241
        %265 = vmatprep.subr.mxu0 0.0
        %266 = vmatpush1.xpose.msra.mxu0 %v244
        %267 = vmatprep.subr.mxu0 0.0
        %268 = vmatpush1.xpose.msra.mxu0 %v247
        %269 = vmatprep.subr.mxu0 0.0
        %270 = vmatpush1.xpose.msra.mxu0 %v250
        %271 = vmatprep.subr.mxu0 0.0
        %272 = vmatpush1.xpose.msra.mxu0 %v253
        %273 = vmatprep.subr.mxu0 0.0
        %274 = vmatpush1.xpose.msra.mxu0 %v256
        %275 = vmatprep.subr.mxu0 0.0
        %276 = vmatpush1.xpose.msra.mxu0 %v259
        %277 = vmatprep.subr.mxu0 0.0
        %278 = vmatpush1.xpose.msra.mxu0 0.0
        %279 = vmatprep.subr.mxu0 0.0
        %280 = vmatpush1.xpose.msra.mxu0 0.0
        %281 = vmatprep.subr.mxu0 0.0
        %282 = vmatpush1.xpose.msra.mxu0 0.0
        %283 = vmatprep.subr.mxu0 0.0
        %284 = vmatpush1.xpose.msra.mxu0 0.0
        %285 = vmatprep.subr.mxu0 0.0
        %286 = vmatpush1.xpose.msra.mxu0 0.0
        %287 = vmatprep.subr.mxu0 0.0
        %288 = vmatpush1.xpose.msra.mxu0 0.0
        %289 = vmatprep.subr.mxu0 0.0
        %290 = vmatpush1.xpose.msra.mxu0 0.0
        %291 = vmatprep.subr.mxu0 0.0
        %292 = vmatpush1.xpose.msra.mxu0 0.0
        %293 = vmatprep.subr.mxu0 0.0
        %294 = vmatpush1.xpose.msra.mxu0 0.0
        %295 = vmatprep.subr.mxu0 0.0
        %296 = vmatpush1.xpose.msra.mxu0 0.0
        %297 = vmatprep.subr.mxu0 0.0
        %298 = vmatpush1.xpose.msra.mxu0 0.0
        %299 = vmatprep.subr.mxu0 0.0
        %300 = vmatpush1.xpose.msra.mxu0 0.0
        %301 = vmatprep.subr.mxu0 0.0
        %302 = vmatpush1.xpose.msra.mxu0 0.0
        %303 = vmatprep.subr.mxu0 0.0
        %304 = vmatpush1.xpose.msra.mxu0 0.0
        %305 = vmatprep.subr.mxu0 0.0
        %306 = vmatpush1.xpose.msra.mxu0 0.0
        %307 = vmatprep.subr.mxu0 0.0
        %308 = vmatpush1.xpose.msra.mxu0 0.0
        %309 = vmatprep.subr.mxu0 0.0
        %310 = vmatpush1.xpose.msra.mxu0 0.0
        %311 = vmatprep.subr.mxu0 0.0
        %312 = vmatpush1.xpose.msra.mxu0 0.0
        %313 = vmatprep.subr.mxu0 0.0
        %314 = vmatpush1.xpose.msra.mxu0 0.0
        %315 = vmatprep.subr.mxu0 0.0
        %316 = vmatpush1.xpose.msra.mxu0 0.0
        %317 = vmatprep.subr.mxu0 0.0
        %318 = vmatpush1.xpose.msra.mxu0 0.0
        %319 = vmatprep.subr.mxu0 0.0
        %320 = vmatpush1.xpose.msra.mxu0 0.0
        %321 = vmatprep.subr.mxu0 0.0
        %322 = vmatpush1.xpose.msra.mxu0 0.0
        %323 = vmatprep.subr.mxu0 0.0
        %324 = vmatpush1.xpose.msra.mxu0 0.0
        %325 = vmatprep.mubr.f32.mxu0 0.0
        %326 = vmatmul.mubr.f32.gmra.mrb[0].mxu0 %v238
        %v327 = vpop.f32.mrb[0].mxu0
        %v328 = vadd.f32 0.0, %v327
        %v329 = vpop.f32.mrb[0].mxu0
        %330 = vmatprep.mubr.f32.mxu0 0.0
        %331 = vmatmul.mubr.f32.gmra.mrb[0].mxu0 %v241
        %v332 = vpop.f32.mrb[0].mxu0
        %v333 = vadd.f32 0.0, %v332
        %v334 = vpop.f32.mrb[0].mxu0
        %335 = vmatprep.mubr.f32.mxu0 0.0
        %336 = vmatmul.mubr.f32.gmra.mrb[0].mxu0 %v244
        %v337 = vpop.f32.mrb[0].mxu0
        %v338 = vadd.f32 0.0, %v337
        %v339 = vpop.f32.mrb[0].mxu0
        %340 = vmatprep.mubr.f32.mxu0 0.0
        %341 = vmatmul.mubr.f32.gmra.mrb[0].mxu0 %v247
        %v342 = vpop.f32.mrb[0].mxu0
        %v343 = vadd.f32 0.0, %v342
        %v344 = vpop.f32.mrb[0].mxu0
        %345 = vmatprep.mubr.f32.mxu0 0.0
        %346 = vmatmul.mubr.f32.gmra.mrb[0].mxu0 %v250
        %v347 = vpop.f32.mrb[0].mxu0
        %v348 = vadd.f32 0.0, %v347
        %v349 = vpop.f32.mrb[0].mxu0
        %350 = vmatprep.mubr.f32.mxu0 0.0
        %351 = vmatmul.mubr.f32.gmra.mrb[0].mxu0 %v253
        %v352 = vpop.f32.mrb[0].mxu0
        %v353 = vadd.f32 0.0, %v352
        %v354 = vpop.f32.mrb[0].mxu0
        %355 = vmatprep.mubr.f32.mxu0 0.0
        %356 = vmatmul.mubr.f32.gmra.mrb[0].mxu0 %v256
        %v357 = vpop.f32.mrb[0].mxu0
        %v358 = vadd.f32 0.0, %v357
        %v359 = vpop.f32.mrb[0].mxu0
        %360 = vmatprep.mubr.f32.mxu0 0.0
        %361 = vmatmul.mubr.f32.gmra.mrb[0].mxu0 %v259
        %v362 = vpop.f32.mrb[0].mxu0
        %v363 = vadd.f32 0.0, %v362
        %v364 = vpop.f32.mrb[0].mxu0
        %365 = vdwg.mxu0
        %v366 = vlaneseq
        %v367 = vshrl.u32 %v366, 7
        %v368 = vadd.s32 %v367, 8
        %v369 = vadd.s32 %v367, 16
        %v370 = vadd.s32 %v367, 24
        %v371 = vadd.s32 %v367, 32
        %v372 = vadd.s32 %v367, 40
        %v373 = vadd.s32 %v367, 48
        %v374 = vadd.s32 %v367, 56
        %v375 = vlaneseq
        %v376 = vand.u32 %v375, 127
        %vm377 = vcmp.eq.s32.totalorder %v367, %v376
        %vm378 = vcmp.eq.s32.totalorder %v368, %v376
        %vm379 = vcmp.eq.s32.totalorder %v369, %v376
        %vm380 = vcmp.eq.s32.totalorder %v370, %v376
        %vm381 = vcmp.eq.s32.totalorder %v371, %v376
        %vm382 = vcmp.eq.s32.totalorder %v372, %v376
        %vm383 = vcmp.eq.s32.totalorder %v373, %v376
        %vm384 = vcmp.eq.s32.totalorder %v374, %v376
        %v385 = vsel %vm377, %v328, 0.0
        %v386 = vsel %vm378, %v333, 0.0
        %v387 = vsel %vm379, %v338, 0.0
        %v388 = vsel %vm380, %v343, 0.0
        %v389 = vsel %vm381, %v348, 0.0
        %v390 = vsel %vm382, %v353, 0.0
        %v391 = vsel %vm383, %v358, 0.0
        %v392 = vsel %vm384, %v363, 0.0
        %vm393 = vcmask 523264
        %v394 = vsel %vm393, %v385, 0.0
        %v395 = vsel %vm393, %v386, 0.0
        %v396 = vadd.f32 %v394, %v395
        %v397 = vsel %vm393, %v387, 0.0
        %v398 = vadd.f32 %v396, %v397
        %v399 = vsel %vm393, %v388, 0.0
        %v400 = vadd.f32 %v398, %v399
        %v401 = vsel %vm393, %v389, 0.0
        %v402 = vadd.f32 %v400, %v401
        %v403 = vsel %vm393, %v390, 0.0
        %v404 = vadd.f32 %v402, %v403
        %v405 = vsel %vm393, %v391, 0.0
        %v406 = vadd.f32 %v404, %v405
        %v407 = vsel %vm393, %v392, 0.0
        %v408 = vadd.f32 %v406, %v407
        %v409 = vrot.slane %v408, 4
        %v410 = vadd.f32 %v408, %v409
        %v411 = vrot.slane %v410, 2
        %v412 = vadd.f32 %v410, %v411
        %v413 = vrot.slane %v412, 1
        %v414 = vadd.f32 %v412, %v413
        %v415 = vmul.f32 %v328, 2.0
        %v416 = vmul.f32 %v333, 2.0
        %v417 = vmul.f32 %v338, 2.0
        %v418 = vmul.f32 %v343, 2.0
        %v419 = vmul.f32 %v348, 2.0
        %v420 = vmul.f32 %v353, 2.0
        %v421 = vmul.f32 %v358, 2.0
        %v422 = vmul.f32 %v363, 2.0
        %v423 = vsub.f32 %v414, %v415
        %v424 = vsub.f32 %v414, %v416
        %v425 = vsub.f32 %v414, %v417
        %v426 = vsub.f32 %v414, %v418
        %v427 = vsub.f32 %v414, %v419
        %v428 = vsub.f32 %v414, %v420
        %v429 = vsub.f32 %v414, %v421
        %v430 = vsub.f32 %v414, %v422
        %v431 = vld [vmem:[%s1] sm:$0xff]
        %v432 = vld [vmem:[%s1 + $0x8] sm:$0xff]
        %433 = vmatprep.subr.mxu0 0.0
        %434 = vmatpush1.msra.mxu0 %v431
        %435 = vmatprep.subr.mxu0 0.0
        %436 = vmatpush1.msra.mxu0 %v432
        %437 = vmatprep.subr.mxu0 0.0
        %438 = vmatpush1.msra.mxu0 0.0
        %439 = vmatprep.subr.mxu0 0.0
        %440 = vmatpush1.msra.mxu0 0.0
        %441 = vmatprep.subr.mxu0 0.0
        %442 = vmatpush1.msra.mxu0 0.0
        %443 = vmatprep.subr.mxu0 0.0
        %444 = vmatpush1.msra.mxu0 0.0
        %445 = vmatprep.subr.mxu0 0.0
        %446 = vmatpush1.msra.mxu0 0.0
        %447 = vmatprep.subr.mxu0 0.0
        %448 = vmatpush1.msra.mxu0 0.0
        %449 = vmatprep.subr.mxu0 0.0
        %450 = vmatpush1.msra.mxu0 0.0
        %451 = vmatprep.subr.mxu0 0.0
        %452 = vmatpush1.msra.mxu0 0.0
        %453 = vmatprep.subr.mxu0 0.0
        %454 = vmatpush1.msra.mxu0 0.0
        %455 = vmatprep.subr.mxu0 0.0
        %456 = vmatpush1.msra.mxu0 0.0
        %457 = vmatprep.subr.mxu0 0.0
        %458 = vmatpush1.msra.mxu0 0.0
        %459 = vmatprep.subr.mxu0 0.0
        %460 = vmatpush1.msra.mxu0 0.0
        %461 = vmatprep.subr.mxu0 0.0
        %462 = vmatpush1.msra.mxu0 0.0
        %463 = vmatprep.subr.mxu0 0.0
        %464 = vmatpush1.msra.mxu0 0.0
        %465 = vmatprep.subr.mxu0 0.0
        %466 = vmatpush1.msra.mxu0 0.0
        %467 = vmatprep.subr.mxu0 0.0
        %468 = vmatpush1.msra.mxu0 0.0
        %469 = vmatprep.subr.mxu0 0.0
        %470 = vmatpush1.msra.mxu0 0.0
        %471 = vmatprep.subr.mxu0 0.0
        %472 = vmatpush1.msra.mxu0 0.0
        %473 = vmatprep.subr.mxu0 0.0
        %474 = vmatpush1.msra.mxu0 0.0
        %475 = vmatprep.subr.mxu0 0.0
        %476 = vmatpush1.msra.mxu0 0.0
        %477 = vmatprep.subr.mxu0 0.0
        %478 = vmatpush1.msra.mxu0 0.0
        %479 = vmatprep.subr.mxu0 0.0
        %480 = vmatpush1.msra.mxu0 0.0
        %481 = vmatprep.subr.mxu0 0.0
        %482 = vmatpush1.msra.mxu0 0.0
        %483 = vmatprep.subr.mxu0 0.0
        %484 = vmatpush1.msra.mxu0 0.0
        %485 = vmatprep.subr.mxu0 0.0
        %486 = vmatpush1.msra.mxu0 0.0
        %487 = vmatprep.subr.mxu0 0.0
        %488 = vmatpush1.msra.mxu0 0.0
        %489 = vmatprep.subr.mxu0 0.0
        %490 = vmatpush1.msra.mxu0 0.0
        %491 = vmatprep.subr.mxu0 0.0
        %492 = vmatpush1.msra.mxu0 0.0
        %493 = vmatprep.subr.mxu0 0.0
        %494 = vmatpush1.msra.mxu0 0.0
        %495 = vmatprep.subr.mxu0 0.0
        %496 = vmatpush1.msra.mxu0 0.0
        %497 = vmatprep.mubr.f32.mxu0 0.0
        %498 = vmatmul.mubr.f32.gmra.mrb[0].mxu0 %v238
        %v499 = vpop.f32.mrb[0].mxu0
        %v500 = vadd.f32 0.0, %v499
        %v501 = vpop.f32.mrb[0].mxu0
        %502 = vmatprep.mubr.f32.mxu0 0.0
        %503 = vmatmul.mubr.f32.gmra.mrb[0].mxu0 %v241
        %v504 = vpop.f32.mrb[0].mxu0
        %v505 = vadd.f32 0.0, %v504
        %v506 = vpop.f32.mrb[0].mxu0
        %507 = vmatprep.mubr.f32.mxu0 0.0
        %508 = vmatmul.mubr.f32.gmra.mrb[0].mxu0 %v244
        %v509 = vpop.f32.mrb[0].mxu0
        %v510 = vadd.f32 0.0, %v509
        %v511 = vpop.f32.mrb[0].mxu0
        %512 = vmatprep.mubr.f32.mxu0 0.0
        %513 = vmatmul.mubr.f32.gmra.mrb[0].mxu0 %v247
        %v514 = vpop.f32.mrb[0].mxu0
        %v515 = vadd.f32 0.0, %v514
        %v516 = vpop.f32.mrb[0].mxu0
        %517 = vmatprep.mubr.f32.mxu0 0.0
        %518 = vmatmul.mubr.f32.gmra.mrb[0].mxu0 %v250
        %v519 = vpop.f32.mrb[0].mxu0
        %v520 = vadd.f32 0.0, %v519
        %v521 = vpop.f32.mrb[0].mxu0
        %522 = vmatprep.mubr.f32.mxu0 0.0
        %523 = vmatmul.mubr.f32.gmra.mrb[0].mxu0 %v253
        %v524 = vpop.f32.mrb[0].mxu0
        %v525 = vadd.f32 0.0, %v524
        %v526 = vpop.f32.mrb[0].mxu0
        %527 = vmatprep.mubr.f32.mxu0 0.0
        %528 = vmatmul.mubr.f32.gmra.mrb[0].mxu0 %v256
        %v529 = vpop.f32.mrb[0].mxu0
        %v530 = vadd.f32 0.0, %v529
        %v531 = vpop.f32.mrb[0].mxu0
        %532 = vmatprep.mubr.f32.mxu0 0.0
        %533 = vmatmul.mubr.f32.gmra.mrb[0].mxu0 %v259
        %v534 = vpop.f32.mrb[0].mxu0
        %v535 = vadd.f32 0.0, %v534
        %v536 = vpop.f32.mrb[0].mxu0
        %537 = vdwg.mxu0
        %v538 = vld [vmem:[%s2] sm:$0xff]
        %v539 = vld [vmem:[%s2 + $0x8] sm:$0xff]
        %540 = vmatprep.subr.mxu0 0.0
        %541 = vmatpush1.msra.mxu0 %v538
        %542 = vmatprep.subr.mxu0 0.0
        %543 = vmatpush1.msra.mxu0 %v539
        %544 = vmatprep.subr.mxu0 0.0
        %545 = vmatpush1.msra.mxu0 0.0
        %546 = vmatprep.subr.mxu0 0.0
        %547 = vmatpush1.msra.mxu0 0.0
        %548 = vmatprep.subr.mxu0 0.0
        %549 = vmatpush1.msra.mxu0 0.0
        %550 = vmatprep.subr.mxu0 0.0
        %551 = vmatpush1.msra.mxu0 0.0
        %552 = vmatprep.subr.mxu0 0.0
        %553 = vmatpush1.msra.mxu0 0.0
        %554 = vmatprep.subr.mxu0 0.0
        %555 = vmatpush1.msra.mxu0 0.0
        %556 = vmatprep.subr.mxu0 0.0
        %557 = vmatpush1.msra.mxu0 0.0
        %558 = vmatprep.subr.mxu0 0.0
        %559 = vmatpush1.msra.mxu0 0.0
        %560 = vmatprep.subr.mxu0 0.0
        %561 = vmatpush1.msra.mxu0 0.0
        %562 = vmatprep.subr.mxu0 0.0
        %563 = vmatpush1.msra.mxu0 0.0
        %564 = vmatprep.subr.mxu0 0.0
        %565 = vmatpush1.msra.mxu0 0.0
        %566 = vmatprep.subr.mxu0 0.0
        %567 = vmatpush1.msra.mxu0 0.0
        %568 = vmatprep.subr.mxu0 0.0
        %569 = vmatpush1.msra.mxu0 0.0
        %570 = vmatprep.subr.mxu0 0.0
        %571 = vmatpush1.msra.mxu0 0.0
        %572 = vmatprep.subr.mxu0 0.0
        %573 = vmatpush1.msra.mxu0 0.0
        %574 = vmatprep.subr.mxu0 0.0
        %575 = vmatpush1.msra.mxu0 0.0
        %576 = vmatprep.subr.mxu0 0.0
        %577 = vmatpush1.msra.mxu0 0.0
        %578 = vmatprep.subr.mxu0 0.0
        %579 = vmatpush1.msra.mxu0 0.0
        %580 = vmatprep.subr.mxu0 0.0
        %581 = vmatpush1.msra.mxu0 0.0
        %582 = vmatprep.subr.mxu0 0.0
        %583 = vmatpush1.msra.mxu0 0.0
        %584 = vmatprep.subr.mxu0 0.0
        %585 = vmatpush1.msra.mxu0 0.0
        %586 = vmatprep.subr.mxu0 0.0
        %587 = vmatpush1.msra.mxu0 0.0
        %588 = vmatprep.subr.mxu0 0.0
        %589 = vmatpush1.msra.mxu0 0.0
        %590 = vmatprep.subr.mxu0 0.0
        %591 = vmatpush1.msra.mxu0 0.0
        %592 = vmatprep.subr.mxu0 0.0
        %593 = vmatpush1.msra.mxu0 0.0
        %594 = vmatprep.subr.mxu0 0.0
        %595 = vmatpush1.msra.mxu0 0.0
        %596 = vmatprep.subr.mxu0 0.0
        %597 = vmatpush1.msra.mxu0 0.0
        %598 = vmatprep.subr.mxu0 0.0
        %599 = vmatpush1.msra.mxu0 0.0
        %600 = vmatprep.subr.mxu0 0.0
        %601 = vmatpush1.msra.mxu0 0.0
        %602 = vmatprep.subr.mxu0 0.0
        %603 = vmatpush1.msra.mxu0 0.0
        %604 = vmatprep.mubr.f32.mxu0 0.0
        %605 = vmatmul.mubr.f32.gmra.mrb[0].mxu0 %v238
        %v606 = vpop.f32.mrb[0].mxu0
        %v607 = vadd.f32 0.0, %v606
        %v608 = vpop.f32.mrb[0].mxu0
        %609 = vmatprep.mubr.f32.mxu0 0.0
        %610 = vmatmul.mubr.f32.gmra.mrb[0].mxu0 %v241
        %v611 = vpop.f32.mrb[0].mxu0
        %v612 = vadd.f32 0.0, %v611
        %v613 = vpop.f32.mrb[0].mxu0
        %614 = vmatprep.mubr.f32.mxu0 0.0
        %615 = vmatmul.mubr.f32.gmra.mrb[0].mxu0 %v244
        %v616 = vpop.f32.mrb[0].mxu0
        %v617 = vadd.f32 0.0, %v616
        %v618 = vpop.f32.mrb[0].mxu0
        %619 = vmatprep.mubr.f32.mxu0 0.0
        %620 = vmatmul.mubr.f32.gmra.mrb[0].mxu0 %v247
        %v621 = vpop.f32.mrb[0].mxu0
        %v622 = vadd.f32 0.0, %v621
        %v623 = vpop.f32.mrb[0].mxu0
        %624 = vmatprep.mubr.f32.mxu0 0.0
        %625 = vmatmul.mubr.f32.gmra.mrb[0].mxu0 %v250
        %v626 = vpop.f32.mrb[0].mxu0
        %v627 = vadd.f32 0.0, %v626
        %v628 = vpop.f32.mrb[0].mxu0
        %629 = vmatprep.mubr.f32.mxu0 0.0
        %630 = vmatmul.mubr.f32.gmra.mrb[0].mxu0 %v253
        %v631 = vpop.f32.mrb[0].mxu0
        %v632 = vadd.f32 0.0, %v631
        %v633 = vpop.f32.mrb[0].mxu0
        %634 = vmatprep.mubr.f32.mxu0 0.0
        %635 = vmatmul.mubr.f32.gmra.mrb[0].mxu0 %v256
        %v636 = vpop.f32.mrb[0].mxu0
        %v637 = vadd.f32 0.0, %v636
        %v638 = vpop.f32.mrb[0].mxu0
        %639 = vmatprep.mubr.f32.mxu0 0.0
        %640 = vmatmul.mubr.f32.gmra.mrb[0].mxu0 %v259
        %v641 = vpop.f32.mrb[0].mxu0
        %v642 = vadd.f32 0.0, %v641
        %v643 = vpop.f32.mrb[0].mxu0
        %644 = vdwg.mxu0
        %v645 = vcvt.s32.f32 %v376
        %v646 = vsel %vm393, %v423, inf
        %647 = vmin.xlane.f32.xlu0 %v646
        %v648 = vpop.xlane.xlu0 %647
        %v649 = vsel %vm393, %v424, inf
        %650 = vmin.xlane.f32.xlu0 %v649
        %v651 = vpop.xlane.xlu0 %650
        %v652 = vsel %vm393, %v425, inf
        %653 = vmin.xlane.f32.xlu0 %v652
        %v654 = vpop.xlane.xlu0 %653
        %v655 = vsel %vm393, %v426, inf
        %656 = vmin.xlane.f32.xlu0 %v655
        %v657 = vpop.xlane.xlu0 %656
        %v658 = vsel %vm393, %v427, inf
        %659 = vmin.xlane.f32.xlu0 %v658
        %v660 = vpop.xlane.xlu0 %659
        %v661 = vsel %vm393, %v428, inf
        %662 = vmin.xlane.f32.xlu0 %v661
        %v663 = vpop.xlane.xlu0 %662
        %v664 = vsel %vm393, %v429, inf
        %665 = vmin.xlane.f32.xlu0 %v664
        %v666 = vpop.xlane.xlu0 %665
        %v667 = vsel %vm393, %v430, inf
        %668 = vmin.xlane.f32.xlu0 %v667
        %v669 = vpop.xlane.xlu0 %668
        %vm670 = vcmp.le.f32.partialorder %v423, %v648
        %vm671 = vcmp.le.f32.partialorder %v424, %v651
        %vm672 = vcmp.le.f32.partialorder %v425, %v654
        %vm673 = vcmp.le.f32.partialorder %v426, %v657
        %vm674 = vcmp.le.f32.partialorder %v427, %v660
        %vm675 = vcmp.le.f32.partialorder %v428, %v663
        %vm676 = vcmp.le.f32.partialorder %v429, %v666
        %vm677 = vcmp.le.f32.partialorder %v430, %v669
        %v678 = vsel %vm670, %v645, 1e+30
        %v679 = vsel %vm671, %v645, 1e+30
        %v680 = vsel %vm672, %v645, 1e+30
        %v681 = vsel %vm673, %v645, 1e+30
        %v682 = vsel %vm674, %v645, 1e+30
        %v683 = vsel %vm675, %v645, 1e+30
        %v684 = vsel %vm676, %v645, 1e+30
        %v685 = vsel %vm677, %v645, 1e+30
        %v686 = vsel %vm393, %v678, inf
        %687 = vmin.xlane.f32.xlu0 %v686
        %v688 = vpop.xlane.xlu0 %687
        %v689 = vsel %vm393, %v679, inf
        %690 = vmin.xlane.f32.xlu0 %v689
        %v691 = vpop.xlane.xlu0 %690
        %v692 = vsel %vm393, %v680, inf
        %693 = vmin.xlane.f32.xlu0 %v692
        %v694 = vpop.xlane.xlu0 %693
        %v695 = vsel %vm393, %v681, inf
        %696 = vmin.xlane.f32.xlu0 %v695
        %v697 = vpop.xlane.xlu0 %696
        %v698 = vsel %vm393, %v682, inf
        %699 = vmin.xlane.f32.xlu0 %v698
        %v700 = vpop.xlane.xlu0 %699
        %v701 = vsel %vm393, %v683, inf
        %702 = vmin.xlane.f32.xlu0 %v701
        %v703 = vpop.xlane.xlu0 %702
        %v704 = vsel %vm393, %v684, inf
        %705 = vmin.xlane.f32.xlu0 %v704
        %v706 = vpop.xlane.xlu0 %705
        %v707 = vsel %vm393, %v685, inf
        %708 = vmin.xlane.f32.xlu0 %v707
        %v709 = vpop.xlane.xlu0 %708
        %vm710 = vcmp.eq.f32.partialorder %v645, %v688
        %vm711 = vcmp.eq.f32.partialorder %v645, %v691
        %vm712 = vcmp.eq.f32.partialorder %v645, %v694
        %vm713 = vcmp.eq.f32.partialorder %v645, %v697
        %vm714 = vcmp.eq.f32.partialorder %v645, %v700
        %vm715 = vcmp.eq.f32.partialorder %v645, %v703
        %vm716 = vcmp.eq.f32.partialorder %v645, %v706
        %vm717 = vcmp.eq.f32.partialorder %v645, %v709
        %v718 = vsel %vm710, 1, 0
        %v719 = vsel %vm711, 1, 0
        %v720 = vsel %vm712, 1, 0
        %v721 = vsel %vm713, 1, 0
        %v722 = vsel %vm714, 1, 0
        %v723 = vsel %vm715, 1, 0
        %v724 = vsel %vm716, 1, 0
        %v725 = vsel %vm717, 1, 0
        %v726 = vcvt.s32.f32 %v718
        %v727 = vcvt.s32.f32 %v719
        %v728 = vcvt.s32.f32 %v720
        %v729 = vcvt.s32.f32 %v721
        %v730 = vcvt.s32.f32 %v722
        %v731 = vcvt.s32.f32 %v723
        %v732 = vcvt.s32.f32 %v724
        %v733 = vcvt.s32.f32 %v725
        %v735 = vsel %vm393, %v726, 0
        %v738 = vsel %vm393, %v727, 0
        %v741 = vsel %vm393, %v728, 0
        %v744 = vsel %vm393, %v729, 0
        %v747 = vsel %vm393, %v730, 0
        %v750 = vsel %vm393, %v731, 0
        %v753 = vsel %vm393, %v732, 0
        %v756 = vsel %vm393, %v733, 0
        %758 = vmatprep.subr.mxu0 0.0
        %759 = vmatpush1.msra.mxu0 %v607
        %760 = vmatprep.subr.mxu0 0.0
        %761 = vmatpush1.msra.mxu0 %v612
        %762 = vmatprep.subr.mxu0 0.0
        %763 = vmatpush1.msra.mxu0 %v617
        %764 = vmatprep.subr.mxu0 0.0
        %765 = vmatpush1.msra.mxu0 %v622
        %766 = vmatprep.subr.mxu0 0.0
        %767 = vmatpush1.msra.mxu0 %v627
        %768 = vmatprep.subr.mxu0 0.0
        %769 = vmatpush1.msra.mxu0 %v632
        %770 = vmatprep.subr.mxu0 0.0
        %771 = vmatpush1.msra.mxu0 %v637
        %772 = vmatprep.subr.mxu0 0.0
        %773 = vmatpush1.msra.mxu0 %v642
        %774 = vmatprep.subr.mxu0 0.0
        %775 = vmatpush1.msra.mxu0 0.0
        %776 = vmatprep.subr.mxu0 0.0
        %777 = vmatpush1.msra.mxu0 0.0
        %778 = vmatprep.subr.mxu0 0.0
        %779 = vmatpush1.msra.mxu0 0.0
        %780 = vmatprep.subr.mxu0 0.0
        %781 = vmatpush1.msra.mxu0 0.0
        %782 = vmatprep.subr.mxu0 0.0
        %783 = vmatpush1.msra.mxu0 0.0
        %784 = vmatprep.subr.mxu0 0.0
        %785 = vmatpush1.msra.mxu0 0.0
        %786 = vmatprep.subr.mxu0 0.0
        %787 = vmatpush1.msra.mxu0 0.0
        %788 = vmatprep.subr.mxu0 0.0
        %789 = vmatpush1.msra.mxu0 0.0
        %790 = vmatprep.subr.mxu0 0.0
        %791 = vmatpush1.msra.mxu0 0.0
        %792 = vmatprep.subr.mxu0 0.0
        %793 = vmatpush1.msra.mxu0 0.0
        %794 = vmatprep.subr.mxu0 0.0
        %795 = vmatpush1.msra.mxu0 0.0
        %796 = vmatprep.subr.mxu0 0.0
        %797 = vmatpush1.msra.mxu0 0.0
        %798 = vmatprep.subr.mxu0 0.0
        %799 = vmatpush1.msra.mxu0 0.0
        %800 = vmatprep.subr.mxu0 0.0
        %801 = vmatpush1.msra.mxu0 0.0
        %802 = vmatprep.subr.mxu0 0.0
        %803 = vmatpush1.msra.mxu0 0.0
        %804 = vmatprep.subr.mxu0 0.0
        %805 = vmatpush1.msra.mxu0 0.0
        %806 = vmatprep.subr.mxu0 0.0
        %807 = vmatpush1.msra.mxu0 0.0
        %808 = vmatprep.subr.mxu0 0.0
        %809 = vmatpush1.msra.mxu0 0.0
        %810 = vmatprep.subr.mxu0 0.0
        %811 = vmatpush1.msra.mxu0 0.0
        %812 = vmatprep.subr.mxu0 0.0
        %813 = vmatpush1.msra.mxu0 0.0
        %814 = vmatprep.subr.mxu0 0.0
        %815 = vmatpush1.msra.mxu0 0.0
        %816 = vmatprep.subr.mxu0 0.0
        %817 = vmatpush1.msra.mxu0 0.0
        %818 = vmatprep.subr.mxu0 0.0
        %819 = vmatpush1.msra.mxu0 0.0
        %820 = vmatprep.subr.mxu0 0.0
        %821 = vmatpush1.msra.mxu0 0.0
        %822 = vmatprep.mubr.f32.mxu0 0.0
        %823 = vmatmul.mubr.f32.gmra.mrb[0].mxu0 %v735
        %v824 = vpop.f32.mrb[0].mxu0
        %v825 = vadd.f32 0.0, %v824
        %v826 = vpop.f32.mrb[0].mxu0
        %827 = vmatprep.mubr.f32.mxu0 0.0
        %828 = vmatmul.mubr.f32.gmra.mrb[0].mxu0 %v738
        %v829 = vpop.f32.mrb[0].mxu0
        %v830 = vadd.f32 0.0, %v829
        %v831 = vpop.f32.mrb[0].mxu0
        %832 = vmatprep.mubr.f32.mxu0 0.0
        %833 = vmatmul.mubr.f32.gmra.mrb[0].mxu0 %v741
        %v834 = vpop.f32.mrb[0].mxu0
        %v835 = vadd.f32 0.0, %v834
        %v836 = vpop.f32.mrb[0].mxu0
        %837 = vmatprep.mubr.f32.mxu0 0.0
        %838 = vmatmul.mubr.f32.gmra.mrb[0].mxu0 %v744
        %v839 = vpop.f32.mrb[0].mxu0
        %v840 = vadd.f32 0.0, %v839
        %v841 = vpop.f32.mrb[0].mxu0
        %842 = vmatprep.mubr.f32.mxu0 0.0
        %843 = vmatmul.mubr.f32.gmra.mrb[0].mxu0 %v747
        %v844 = vpop.f32.mrb[0].mxu0
        %v845 = vadd.f32 0.0, %v844
        %v846 = vpop.f32.mrb[0].mxu0
        %847 = vmatprep.mubr.f32.mxu0 0.0
        %848 = vmatmul.mubr.f32.gmra.mrb[0].mxu0 %v750
        %v849 = vpop.f32.mrb[0].mxu0
        %v850 = vadd.f32 0.0, %v849
        %v851 = vpop.f32.mrb[0].mxu0
        %852 = vmatprep.mubr.f32.mxu0 0.0
        %853 = vmatmul.mubr.f32.gmra.mrb[0].mxu0 %v753
        %v854 = vpop.f32.mrb[0].mxu0
        %v855 = vadd.f32 0.0, %v854
        %v856 = vpop.f32.mrb[0].mxu0
        %857 = vmatprep.mubr.f32.mxu0 0.0
        %858 = vmatmul.mubr.f32.gmra.mrb[0].mxu0 %v756
        %v859 = vpop.f32.mrb[0].mxu0
        %v860 = vadd.f32 0.0, %v859
        %v861 = vpop.f32.mrb[0].mxu0
        %862 = vdwg.mxu0
        %v863 = vadd.f32 %v500, %v825
        %v864 = vadd.f32 %v505, %v830
        %v865 = vadd.f32 %v510, %v835
        %v866 = vadd.f32 %v515, %v840
        %v867 = vadd.f32 %v520, %v845
        %v868 = vadd.f32 %v525, %v850
        %v869 = vadd.f32 %v530, %v855
        %v870 = vadd.f32 %v535, %v860
        %v872 = vlaneseq
        %v873 = vshrl.u32 %v872, 7
        %v874 = vsub.s32 0, %v873
        %v875 = vrot.slane %v234, %v874
        %v877 = vmul.f32 %v875, %v863
        %v878 = vmul.f32 %v875, %v864
        %v879 = vmul.f32 %v875, %v865
        %v880 = vmul.f32 %v875, %v866
        %v881 = vmul.f32 %v875, %v867
        %v882 = vmul.f32 %v875, %v868
        %v883 = vmul.f32 %v875, %v869
        %v884 = vmul.f32 %v875, %v870
        %v886 = vlaneseq
        %v887 = vshrl.u32 %v886, 7
        %v888 = vsub.s32 0, %v887
        %v889 = vrot.slane %v235, %v888
        %v891 = vadd.f32 %v877, %v889
        %v892 = vadd.f32 %v878, %v889
        %v893 = vadd.f32 %v879, %v889
        %v894 = vadd.f32 %v880, %v889
        %v895 = vadd.f32 %v881, %v889
        %v896 = vadd.f32 %v882, %v889
        %v897 = vadd.f32 %v883, %v889
        %v898 = vadd.f32 %v884, %v889
        %v899 = vmax.f32 %v891, 0.0
        %v900 = vmax.f32 %v892, 0.0
        %v901 = vmax.f32 %v893, 0.0
        %v902 = vmax.f32 %v894, 0.0
        %v903 = vmax.f32 %v895, 0.0
        %v904 = vmax.f32 %v896, 0.0
        %v905 = vmax.f32 %v897, 0.0
        %v906 = vmax.f32 %v898, 0.0
        %v907 = vmax.f32 %v899, 0.0
        %v908 = vmax.f32 %v900, 0.0
        %v909 = vmax.f32 %v901, 0.0
        %v910 = vmax.f32 %v902, 0.0
        %v911 = vmax.f32 %v903, 0.0
        %v912 = vmax.f32 %v904, 0.0
        %v913 = vmax.f32 %v905, 0.0
        %v914 = vmax.f32 %v906, 0.0
        %v915 = vsel %vm710, 1e+30, %v423
        %v916 = vsel %vm711, 1e+30, %v424
        %v917 = vsel %vm712, 1e+30, %v425
        %v918 = vsel %vm713, 1e+30, %v426
        %v919 = vsel %vm714, 1e+30, %v427
        %v920 = vsel %vm715, 1e+30, %v428
        %v921 = vsel %vm716, 1e+30, %v429
        %v922 = vsel %vm717, 1e+30, %v430
        %v923 = vsel %vm393, %v915, inf
        %924 = vmin.xlane.f32.xlu0 %v923
        %v925 = vpop.xlane.xlu0 %924
        %v926 = vsel %vm393, %v916, inf
        %927 = vmin.xlane.f32.xlu0 %v926
        %v928 = vpop.xlane.xlu0 %927
        %v929 = vsel %vm393, %v917, inf
        %930 = vmin.xlane.f32.xlu0 %v929
        %v931 = vpop.xlane.xlu0 %930
        %v932 = vsel %vm393, %v918, inf
        %933 = vmin.xlane.f32.xlu0 %v932
        %v934 = vpop.xlane.xlu0 %933
        %v935 = vsel %vm393, %v919, inf
        %936 = vmin.xlane.f32.xlu0 %v935
        %v937 = vpop.xlane.xlu0 %936
        %v938 = vsel %vm393, %v920, inf
        %939 = vmin.xlane.f32.xlu0 %v938
        %v940 = vpop.xlane.xlu0 %939
        %v941 = vsel %vm393, %v921, inf
        %942 = vmin.xlane.f32.xlu0 %v941
        %v943 = vpop.xlane.xlu0 %942
        %v944 = vsel %vm393, %v922, inf
        %945 = vmin.xlane.f32.xlu0 %v944
        %v946 = vpop.xlane.xlu0 %945
        %vm947 = vcmp.le.f32.partialorder %v915, %v925
        %vm948 = vcmp.le.f32.partialorder %v916, %v928
        %vm949 = vcmp.le.f32.partialorder %v917, %v931
        %vm950 = vcmp.le.f32.partialorder %v918, %v934
        %vm951 = vcmp.le.f32.partialorder %v919, %v937
        %vm952 = vcmp.le.f32.partialorder %v920, %v940
        %vm953 = vcmp.le.f32.partialorder %v921, %v943
        %vm954 = vcmp.le.f32.partialorder %v922, %v946
        %v955 = vsel %vm947, %v645, 1e+30
        %v956 = vsel %vm948, %v645, 1e+30
        %v957 = vsel %vm949, %v645, 1e+30
        %v958 = vsel %vm950, %v645, 1e+30
        %v959 = vsel %vm951, %v645, 1e+30
        %v960 = vsel %vm952, %v645, 1e+30
        %v961 = vsel %vm953, %v645, 1e+30
        %v962 = vsel %vm954, %v645, 1e+30
        %v963 = vsel %vm393, %v955, inf
        %964 = vmin.xlane.f32.xlu0 %v963
        %v965 = vpop.xlane.xlu0 %964
        %v966 = vsel %vm393, %v956, inf
        %967 = vmin.xlane.f32.xlu0 %v966
        %v968 = vpop.xlane.xlu0 %967
        %v969 = vsel %vm393, %v957, inf
        %970 = vmin.xlane.f32.xlu0 %v969
        %v971 = vpop.xlane.xlu0 %970
        %v972 = vsel %vm393, %v958, inf
        %973 = vmin.xlane.f32.xlu0 %v972
        %v974 = vpop.xlane.xlu0 %973
        %v975 = vsel %vm393, %v959, inf
        %976 = vmin.xlane.f32.xlu0 %v975
        %v977 = vpop.xlane.xlu0 %976
        %v978 = vsel %vm393, %v960, inf
        %979 = vmin.xlane.f32.xlu0 %v978
        %v980 = vpop.xlane.xlu0 %979
        %v981 = vsel %vm393, %v961, inf
        %982 = vmin.xlane.f32.xlu0 %v981
        %v983 = vpop.xlane.xlu0 %982
        %v984 = vsel %vm393, %v962, inf
        %985 = vmin.xlane.f32.xlu0 %v984
        %v986 = vpop.xlane.xlu0 %985
        %vm987 = vcmp.eq.f32.partialorder %v645, %v965
        %vm988 = vcmp.eq.f32.partialorder %v645, %v968
        %vm989 = vcmp.eq.f32.partialorder %v645, %v971
        %vm990 = vcmp.eq.f32.partialorder %v645, %v974
        %vm991 = vcmp.eq.f32.partialorder %v645, %v977
        %vm992 = vcmp.eq.f32.partialorder %v645, %v980
        %vm993 = vcmp.eq.f32.partialorder %v645, %v983
        %vm994 = vcmp.eq.f32.partialorder %v645, %v986
        %v995 = vsel %vm987, 1e+30, %v915
        %v996 = vsel %vm988, 1e+30, %v916
        %v997 = vsel %vm989, 1e+30, %v917
        %v998 = vsel %vm990, 1e+30, %v918
        %v999 = vsel %vm991, 1e+30, %v919
        %v1000 = vsel %vm992, 1e+30, %v920
        %v1001 = vsel %vm993, 1e+30, %v921
        %v1002 = vsel %vm994, 1e+30, %v922
        %v1003 = vsel %vm393, %v995, inf
        %1004 = vmin.xlane.f32.xlu0 %v1003
        %v1005 = vpop.xlane.xlu0 %1004
        %v1006 = vsel %vm393, %v996, inf
        %1007 = vmin.xlane.f32.xlu0 %v1006
        %v1008 = vpop.xlane.xlu0 %1007
        %v1009 = vsel %vm393, %v997, inf
        %1010 = vmin.xlane.f32.xlu0 %v1009
        %v1011 = vpop.xlane.xlu0 %1010
        %v1012 = vsel %vm393, %v998, inf
        %1013 = vmin.xlane.f32.xlu0 %v1012
        %v1014 = vpop.xlane.xlu0 %1013
        %v1015 = vsel %vm393, %v999, inf
        %1016 = vmin.xlane.f32.xlu0 %v1015
        %v1017 = vpop.xlane.xlu0 %1016
        %v1018 = vsel %vm393, %v1000, inf
        %1019 = vmin.xlane.f32.xlu0 %v1018
        %v1020 = vpop.xlane.xlu0 %1019
        %v1021 = vsel %vm393, %v1001, inf
        %1022 = vmin.xlane.f32.xlu0 %v1021
        %v1023 = vpop.xlane.xlu0 %1022
        %v1024 = vsel %vm393, %v1002, inf
        %1025 = vmin.xlane.f32.xlu0 %v1024
        %v1026 = vpop.xlane.xlu0 %1025
        %vm1027 = vcmp.le.f32.partialorder %v995, %v1005
        %vm1028 = vcmp.le.f32.partialorder %v996, %v1008
        %vm1029 = vcmp.le.f32.partialorder %v997, %v1011
        %vm1030 = vcmp.le.f32.partialorder %v998, %v1014
        %vm1031 = vcmp.le.f32.partialorder %v999, %v1017
        %vm1032 = vcmp.le.f32.partialorder %v1000, %v1020
        %vm1033 = vcmp.le.f32.partialorder %v1001, %v1023
        %vm1034 = vcmp.le.f32.partialorder %v1002, %v1026
        %v1035 = vsel %vm1027, %v645, 1e+30
        %v1036 = vsel %vm1028, %v645, 1e+30
        %v1037 = vsel %vm1029, %v645, 1e+30
        %v1038 = vsel %vm1030, %v645, 1e+30
        %v1039 = vsel %vm1031, %v645, 1e+30
        %v1040 = vsel %vm1032, %v645, 1e+30
        %v1041 = vsel %vm1033, %v645, 1e+30
        %v1042 = vsel %vm1034, %v645, 1e+30
        %v1043 = vsel %vm393, %v1035, inf
        %1044 = vmin.xlane.f32.xlu0 %v1043
        %v1045 = vpop.xlane.xlu0 %1044
        %v1046 = vsel %vm393, %v1036, inf
        %1047 = vmin.xlane.f32.xlu0 %v1046
        %v1048 = vpop.xlane.xlu0 %1047
        %v1049 = vsel %vm393, %v1037, inf
        %1050 = vmin.xlane.f32.xlu0 %v1049
        %v1051 = vpop.xlane.xlu0 %1050
        %v1052 = vsel %vm393, %v1038, inf
        %1053 = vmin.xlane.f32.xlu0 %v1052
        %v1054 = vpop.xlane.xlu0 %1053
        %v1055 = vsel %vm393, %v1039, inf
        %1056 = vmin.xlane.f32.xlu0 %v1055
        %v1057 = vpop.xlane.xlu0 %1056
        %v1058 = vsel %vm393, %v1040, inf
        %1059 = vmin.xlane.f32.xlu0 %v1058
        %v1060 = vpop.xlane.xlu0 %1059
        %v1061 = vsel %vm393, %v1041, inf
        %1062 = vmin.xlane.f32.xlu0 %v1061
        %v1063 = vpop.xlane.xlu0 %1062
        %v1064 = vsel %vm393, %v1042, inf
        %1065 = vmin.xlane.f32.xlu0 %v1064
        %v1066 = vpop.xlane.xlu0 %1065
        %vm1067 = vcmp.eq.f32.partialorder %v645, %v1045
        %vm1068 = vcmp.eq.f32.partialorder %v645, %v1048
        %vm1069 = vcmp.eq.f32.partialorder %v645, %v1051
        %vm1070 = vcmp.eq.f32.partialorder %v645, %v1054
        %vm1071 = vcmp.eq.f32.partialorder %v645, %v1057
        %vm1072 = vcmp.eq.f32.partialorder %v645, %v1060
        %vm1073 = vcmp.eq.f32.partialorder %v645, %v1063
        %vm1074 = vcmp.eq.f32.partialorder %v645, %v1066
        %v1075 = vsel %vm1067, 1, 0
        %v1076 = vsel %vm1068, 1, 0
        %v1077 = vsel %vm1069, 1, 0
        %v1078 = vsel %vm1070, 1, 0
        %v1079 = vsel %vm1071, 1, 0
        %v1080 = vsel %vm1072, 1, 0
        %v1081 = vsel %vm1073, 1, 0
        %v1082 = vsel %vm1074, 1, 0
        %v1083 = vcvt.s32.f32 %v1075
        %v1084 = vcvt.s32.f32 %v1076
        %v1085 = vcvt.s32.f32 %v1077
        %v1086 = vcvt.s32.f32 %v1078
        %v1087 = vcvt.s32.f32 %v1079
        %v1088 = vcvt.s32.f32 %v1080
        %v1089 = vcvt.s32.f32 %v1081
        %v1090 = vcvt.s32.f32 %v1082
        %v1092 = vsel %vm393, %v1083, 0
        %v1095 = vsel %vm393, %v1084, 0
        %v1098 = vsel %vm393, %v1085, 0
        %v1101 = vsel %vm393, %v1086, 0
        %v1104 = vsel %vm393, %v1087, 0
        %v1107 = vsel %vm393, %v1088, 0
        %v1110 = vsel %vm393, %v1089, 0
        %v1113 = vsel %vm393, %v1090, 0
        %1115 = vmatprep.subr.mxu0 0.0
        %1116 = vmatpush1.msra.mxu0 %v607
        %1117 = vmatprep.subr.mxu0 0.0
        %1118 = vmatpush1.msra.mxu0 %v612
        %1119 = vmatprep.subr.mxu0 0.0
        %1120 = vmatpush1.msra.mxu0 %v617
        %1121 = vmatprep.subr.mxu0 0.0
        %1122 = vmatpush1.msra.mxu0 %v622
        %1123 = vmatprep.subr.mxu0 0.0
        %1124 = vmatpush1.msra.mxu0 %v627
        %1125 = vmatprep.subr.mxu0 0.0
        %1126 = vmatpush1.msra.mxu0 %v632
        %1127 = vmatprep.subr.mxu0 0.0
        %1128 = vmatpush1.msra.mxu0 %v637
        %1129 = vmatprep.subr.mxu0 0.0
        %1130 = vmatpush1.msra.mxu0 %v642
        %1131 = vmatprep.subr.mxu0 0.0
        %1132 = vmatpush1.msra.mxu0 0.0
        %1133 = vmatprep.subr.mxu0 0.0
        %1134 = vmatpush1.msra.mxu0 0.0
        %1135 = vmatprep.subr.mxu0 0.0
        %1136 = vmatpush1.msra.mxu0 0.0
        %1137 = vmatprep.subr.mxu0 0.0
        %1138 = vmatpush1.msra.mxu0 0.0
        %1139 = vmatprep.subr.mxu0 0.0
        %1140 = vmatpush1.msra.mxu0 0.0
        %1141 = vmatprep.subr.mxu0 0.0
        %1142 = vmatpush1.msra.mxu0 0.0
        %1143 = vmatprep.subr.mxu0 0.0
        %1144 = vmatpush1.msra.mxu0 0.0
        %1145 = vmatprep.subr.mxu0 0.0
        %1146 = vmatpush1.msra.mxu0 0.0
        %1147 = vmatprep.subr.mxu0 0.0
        %1148 = vmatpush1.msra.mxu0 0.0
        %1149 = vmatprep.subr.mxu0 0.0
        %1150 = vmatpush1.msra.mxu0 0.0
        %1151 = vmatprep.subr.mxu0 0.0
        %1152 = vmatpush1.msra.mxu0 0.0
        %1153 = vmatprep.subr.mxu0 0.0
        %1154 = vmatpush1.msra.mxu0 0.0
        %1155 = vmatprep.subr.mxu0 0.0
        %1156 = vmatpush1.msra.mxu0 0.0
        %1157 = vmatprep.subr.mxu0 0.0
        %1158 = vmatpush1.msra.mxu0 0.0
        %1159 = vmatprep.subr.mxu0 0.0
        %1160 = vmatpush1.msra.mxu0 0.0
        %1161 = vmatprep.subr.mxu0 0.0
        %1162 = vmatpush1.msra.mxu0 0.0
        %1163 = vmatprep.subr.mxu0 0.0
        %1164 = vmatpush1.msra.mxu0 0.0
        %1165 = vmatprep.subr.mxu0 0.0
        %1166 = vmatpush1.msra.mxu0 0.0
        %1167 = vmatprep.subr.mxu0 0.0
        %1168 = vmatpush1.msra.mxu0 0.0
        %1169 = vmatprep.subr.mxu0 0.0
        %1170 = vmatpush1.msra.mxu0 0.0
        %1171 = vmatprep.subr.mxu0 0.0
        %1172 = vmatpush1.msra.mxu0 0.0
        %1173 = vmatprep.subr.mxu0 0.0
        %1174 = vmatpush1.msra.mxu0 0.0
        %1175 = vmatprep.subr.mxu0 0.0
        %1176 = vmatpush1.msra.mxu0 0.0
        %1177 = vmatprep.subr.mxu0 0.0
        %1178 = vmatpush1.msra.mxu0 0.0
        %1179 = vmatprep.mubr.f32.mxu0 0.0
        %1180 = vmatmul.mubr.f32.gmra.mrb[0].mxu0 %v1092
        %v1181 = vpop.f32.mrb[0].mxu0
        %v1182 = vadd.f32 0.0, %v1181
        %v1183 = vpop.f32.mrb[0].mxu0
        %1184 = vmatprep.mubr.f32.mxu0 0.0
        %1185 = vmatmul.mubr.f32.gmra.mrb[0].mxu0 %v1095
        %v1186 = vpop.f32.mrb[0].mxu0
        %v1187 = vadd.f32 0.0, %v1186
        %v1188 = vpop.f32.mrb[0].mxu0
        %1189 = vmatprep.mubr.f32.mxu0 0.0
        %1190 = vmatmul.mubr.f32.gmra.mrb[0].mxu0 %v1098
        %v1191 = vpop.f32.mrb[0].mxu0
        %v1192 = vadd.f32 0.0, %v1191
        %v1193 = vpop.f32.mrb[0].mxu0
        %1194 = vmatprep.mubr.f32.mxu0 0.0
        %1195 = vmatmul.mubr.f32.gmra.mrb[0].mxu0 %v1101
        %v1196 = vpop.f32.mrb[0].mxu0
        %v1197 = vadd.f32 0.0, %v1196
        %v1198 = vpop.f32.mrb[0].mxu0
        %1199 = vmatprep.mubr.f32.mxu0 0.0
        %1200 = vmatmul.mubr.f32.gmra.mrb[0].mxu0 %v1104
        %v1201 = vpop.f32.mrb[0].mxu0
        %v1202 = vadd.f32 0.0, %v1201
        %v1203 = vpop.f32.mrb[0].mxu0
        %1204 = vmatprep.mubr.f32.mxu0 0.0
        %1205 = vmatmul.mubr.f32.gmra.mrb[0].mxu0 %v1107
        %v1206 = vpop.f32.mrb[0].mxu0
        %v1207 = vadd.f32 0.0, %v1206
        %v1208 = vpop.f32.mrb[0].mxu0
        %1209 = vmatprep.mubr.f32.mxu0 0.0
        %1210 = vmatmul.mubr.f32.gmra.mrb[0].mxu0 %v1110
        %v1211 = vpop.f32.mrb[0].mxu0
        %v1212 = vadd.f32 0.0, %v1211
        %v1213 = vpop.f32.mrb[0].mxu0
        %1214 = vmatprep.mubr.f32.mxu0 0.0
        %1215 = vmatmul.mubr.f32.gmra.mrb[0].mxu0 %v1113
        %v1216 = vpop.f32.mrb[0].mxu0
        %v1217 = vadd.f32 0.0, %v1216
        %v1218 = vpop.f32.mrb[0].mxu0
        %1219 = vdwg.mxu0
        %v1220 = vadd.f32 %v500, %v1182
        %v1221 = vadd.f32 %v505, %v1187
        %v1222 = vadd.f32 %v510, %v1192
        %v1223 = vadd.f32 %v515, %v1197
        %v1224 = vadd.f32 %v520, %v1202
        %v1225 = vadd.f32 %v525, %v1207
        %v1226 = vadd.f32 %v530, %v1212
        %v1227 = vadd.f32 %v535, %v1217
        %v1228 = vmul.f32 %v875, %v1220
        %v1229 = vmul.f32 %v875, %v1221
        %v1230 = vmul.f32 %v875, %v1222
        %v1231 = vmul.f32 %v875, %v1223
        %v1232 = vmul.f32 %v875, %v1224
        %v1233 = vmul.f32 %v875, %v1225
        %v1234 = vmul.f32 %v875, %v1226
        %v1235 = vmul.f32 %v875, %v1227
        %v1236 = vadd.f32 %v1228, %v889
        %v1237 = vadd.f32 %v1229, %v889
        %v1238 = vadd.f32 %v1230, %v889
        %v1239 = vadd.f32 %v1231, %v889
        %v1240 = vadd.f32 %v1232, %v889
        %v1241 = vadd.f32 %v1233, %v889
        %v1242 = vadd.f32 %v1234, %v889
        %v1243 = vadd.f32 %v1235, %v889
        %v1244 = vmax.f32 %v1236, 0.0
        %v1245 = vmax.f32 %v1237, 0.0
        %v1246 = vmax.f32 %v1238, 0.0
        %v1247 = vmax.f32 %v1239, 0.0
        %v1248 = vmax.f32 %v1240, 0.0
        %v1249 = vmax.f32 %v1241, 0.0
        %v1250 = vmax.f32 %v1242, 0.0
        %v1251 = vmax.f32 %v1243, 0.0
        %v1252 = vmax.f32 %v907, %v1244
        %v1253 = vmax.f32 %v908, %v1245
        %v1254 = vmax.f32 %v909, %v1246
        %v1255 = vmax.f32 %v910, %v1247
        %v1256 = vmax.f32 %v911, %v1248
        %v1257 = vmax.f32 %v912, %v1249
        %v1258 = vmax.f32 %v913, %v1250
        %v1259 = vmax.f32 %v914, %v1251
        %v1260 = vsel %vm1067, 1e+30, %v995
        %v1261 = vsel %vm1068, 1e+30, %v996
        %v1262 = vsel %vm1069, 1e+30, %v997
        %v1263 = vsel %vm1070, 1e+30, %v998
        %v1264 = vsel %vm1071, 1e+30, %v999
        %v1265 = vsel %vm1072, 1e+30, %v1000
        %v1266 = vsel %vm1073, 1e+30, %v1001
        %v1267 = vsel %vm1074, 1e+30, %v1002
        %v1268 = vsel %vm393, %v1260, inf
        %1269 = vmin.xlane.f32.xlu0 %v1268
        %v1270 = vpop.xlane.xlu0 %1269
        %v1271 = vsel %vm393, %v1261, inf
        %1272 = vmin.xlane.f32.xlu0 %v1271
        %v1273 = vpop.xlane.xlu0 %1272
        %v1274 = vsel %vm393, %v1262, inf
        %1275 = vmin.xlane.f32.xlu0 %v1274
        %v1276 = vpop.xlane.xlu0 %1275
        %v1277 = vsel %vm393, %v1263, inf
        %1278 = vmin.xlane.f32.xlu0 %v1277
        %v1279 = vpop.xlane.xlu0 %1278
        %v1280 = vsel %vm393, %v1264, inf
        %1281 = vmin.xlane.f32.xlu0 %v1280
        %v1282 = vpop.xlane.xlu0 %1281
        %v1283 = vsel %vm393, %v1265, inf
        %1284 = vmin.xlane.f32.xlu0 %v1283
        %v1285 = vpop.xlane.xlu0 %1284
        %v1286 = vsel %vm393, %v1266, inf
        %1287 = vmin.xlane.f32.xlu0 %v1286
        %v1288 = vpop.xlane.xlu0 %1287
        %v1289 = vsel %vm393, %v1267, inf
        %1290 = vmin.xlane.f32.xlu0 %v1289
        %v1291 = vpop.xlane.xlu0 %1290
        %vm1292 = vcmp.le.f32.partialorder %v1260, %v1270
        %vm1293 = vcmp.le.f32.partialorder %v1261, %v1273
        %vm1294 = vcmp.le.f32.partialorder %v1262, %v1276
        %vm1295 = vcmp.le.f32.partialorder %v1263, %v1279
        %vm1296 = vcmp.le.f32.partialorder %v1264, %v1282
        %vm1297 = vcmp.le.f32.partialorder %v1265, %v1285
        %vm1298 = vcmp.le.f32.partialorder %v1266, %v1288
        %vm1299 = vcmp.le.f32.partialorder %v1267, %v1291
        %v1300 = vsel %vm1292, %v645, 1e+30
        %v1301 = vsel %vm1293, %v645, 1e+30
        %v1302 = vsel %vm1294, %v645, 1e+30
        %v1303 = vsel %vm1295, %v645, 1e+30
        %v1304 = vsel %vm1296, %v645, 1e+30
        %v1305 = vsel %vm1297, %v645, 1e+30
        %v1306 = vsel %vm1298, %v645, 1e+30
        %v1307 = vsel %vm1299, %v645, 1e+30
        %v1308 = vsel %vm393, %v1300, inf
        %1309 = vmin.xlane.f32.xlu0 %v1308
        %v1310 = vpop.xlane.xlu0 %1309
        %v1311 = vsel %vm393, %v1301, inf
        %1312 = vmin.xlane.f32.xlu0 %v1311
        %v1313 = vpop.xlane.xlu0 %1312
        %v1314 = vsel %vm393, %v1302, inf
        %1315 = vmin.xlane.f32.xlu0 %v1314
        %v1316 = vpop.xlane.xlu0 %1315
        %v1317 = vsel %vm393, %v1303, inf
        %1318 = vmin.xlane.f32.xlu0 %v1317
        %v1319 = vpop.xlane.xlu0 %1318
        %v1320 = vsel %vm393, %v1304, inf
        %1321 = vmin.xlane.f32.xlu0 %v1320
        %v1322 = vpop.xlane.xlu0 %1321
        %v1323 = vsel %vm393, %v1305, inf
        %1324 = vmin.xlane.f32.xlu0 %v1323
        %v1325 = vpop.xlane.xlu0 %1324
        %v1326 = vsel %vm393, %v1306, inf
        %1327 = vmin.xlane.f32.xlu0 %v1326
        %v1328 = vpop.xlane.xlu0 %1327
        %v1329 = vsel %vm393, %v1307, inf
        %1330 = vmin.xlane.f32.xlu0 %v1329
        %v1331 = vpop.xlane.xlu0 %1330
        %vm1332 = vcmp.eq.f32.partialorder %v645, %v1310
        %vm1333 = vcmp.eq.f32.partialorder %v645, %v1313
        %vm1334 = vcmp.eq.f32.partialorder %v645, %v1316
        %vm1335 = vcmp.eq.f32.partialorder %v645, %v1319
        %vm1336 = vcmp.eq.f32.partialorder %v645, %v1322
        %vm1337 = vcmp.eq.f32.partialorder %v645, %v1325
        %vm1338 = vcmp.eq.f32.partialorder %v645, %v1328
        %vm1339 = vcmp.eq.f32.partialorder %v645, %v1331
        %v1340 = vsel %vm1332, 1e+30, %v1260
        %v1341 = vsel %vm1333, 1e+30, %v1261
        %v1342 = vsel %vm1334, 1e+30, %v1262
        %v1343 = vsel %vm1335, 1e+30, %v1263
        %v1344 = vsel %vm1336, 1e+30, %v1264
        %v1345 = vsel %vm1337, 1e+30, %v1265
        %v1346 = vsel %vm1338, 1e+30, %v1266
        %v1347 = vsel %vm1339, 1e+30, %v1267
        %v1348 = vsel %vm393, %v1340, inf
        %1349 = vmin.xlane.f32.xlu0 %v1348
        %v1350 = vpop.xlane.xlu0 %1349
        %v1351 = vsel %vm393, %v1341, inf
        %1352 = vmin.xlane.f32.xlu0 %v1351
        %v1353 = vpop.xlane.xlu0 %1352
        %v1354 = vsel %vm393, %v1342, inf
        %1355 = vmin.xlane.f32.xlu0 %v1354
        %v1356 = vpop.xlane.xlu0 %1355
        %v1357 = vsel %vm393, %v1343, inf
        %1358 = vmin.xlane.f32.xlu0 %v1357
        %v1359 = vpop.xlane.xlu0 %1358
        %v1360 = vsel %vm393, %v1344, inf
        %1361 = vmin.xlane.f32.xlu0 %v1360
        %v1362 = vpop.xlane.xlu0 %1361
        %v1363 = vsel %vm393, %v1345, inf
        %1364 = vmin.xlane.f32.xlu0 %v1363
        %v1365 = vpop.xlane.xlu0 %1364
        %v1366 = vsel %vm393, %v1346, inf
        %1367 = vmin.xlane.f32.xlu0 %v1366
        %v1368 = vpop.xlane.xlu0 %1367
        %v1369 = vsel %vm393, %v1347, inf
        %1370 = vmin.xlane.f32.xlu0 %v1369
        %v1371 = vpop.xlane.xlu0 %1370
        %vm1372 = vcmp.le.f32.partialorder %v1340, %v1350
        %vm1373 = vcmp.le.f32.partialorder %v1341, %v1353
        %vm1374 = vcmp.le.f32.partialorder %v1342, %v1356
        %vm1375 = vcmp.le.f32.partialorder %v1343, %v1359
        %vm1376 = vcmp.le.f32.partialorder %v1344, %v1362
        %vm1377 = vcmp.le.f32.partialorder %v1345, %v1365
        %vm1378 = vcmp.le.f32.partialorder %v1346, %v1368
        %vm1379 = vcmp.le.f32.partialorder %v1347, %v1371
        %v1380 = vsel %vm1372, %v645, 1e+30
        %v1381 = vsel %vm1373, %v645, 1e+30
        %v1382 = vsel %vm1374, %v645, 1e+30
        %v1383 = vsel %vm1375, %v645, 1e+30
        %v1384 = vsel %vm1376, %v645, 1e+30
        %v1385 = vsel %vm1377, %v645, 1e+30
        %v1386 = vsel %vm1378, %v645, 1e+30
        %v1387 = vsel %vm1379, %v645, 1e+30
        %v1388 = vsel %vm393, %v1380, inf
        %1389 = vmin.xlane.f32.xlu0 %v1388
        %v1390 = vpop.xlane.xlu0 %1389
        %v1391 = vsel %vm393, %v1381, inf
        %1392 = vmin.xlane.f32.xlu0 %v1391
        %v1393 = vpop.xlane.xlu0 %1392
        %v1394 = vsel %vm393, %v1382, inf
        %1395 = vmin.xlane.f32.xlu0 %v1394
        %v1396 = vpop.xlane.xlu0 %1395
        %v1397 = vsel %vm393, %v1383, inf
        %1398 = vmin.xlane.f32.xlu0 %v1397
        %v1399 = vpop.xlane.xlu0 %1398
        %v1400 = vsel %vm393, %v1384, inf
        %1401 = vmin.xlane.f32.xlu0 %v1400
        %v1402 = vpop.xlane.xlu0 %1401
        %v1403 = vsel %vm393, %v1385, inf
        %1404 = vmin.xlane.f32.xlu0 %v1403
        %v1405 = vpop.xlane.xlu0 %1404
        %v1406 = vsel %vm393, %v1386, inf
        %1407 = vmin.xlane.f32.xlu0 %v1406
        %v1408 = vpop.xlane.xlu0 %1407
        %v1409 = vsel %vm393, %v1387, inf
        %1410 = vmin.xlane.f32.xlu0 %v1409
        %v1411 = vpop.xlane.xlu0 %1410
        %vm1412 = vcmp.eq.f32.partialorder %v645, %v1390
        %vm1413 = vcmp.eq.f32.partialorder %v645, %v1393
        %vm1414 = vcmp.eq.f32.partialorder %v645, %v1396
        %vm1415 = vcmp.eq.f32.partialorder %v645, %v1399
        %vm1416 = vcmp.eq.f32.partialorder %v645, %v1402
        %vm1417 = vcmp.eq.f32.partialorder %v645, %v1405
        %vm1418 = vcmp.eq.f32.partialorder %v645, %v1408
        %vm1419 = vcmp.eq.f32.partialorder %v645, %v1411
        %v1420 = vsel %vm1412, 1, 0
        %v1421 = vsel %vm1413, 1, 0
        %v1422 = vsel %vm1414, 1, 0
        %v1423 = vsel %vm1415, 1, 0
        %v1424 = vsel %vm1416, 1, 0
        %v1425 = vsel %vm1417, 1, 0
        %v1426 = vsel %vm1418, 1, 0
        %v1427 = vsel %vm1419, 1, 0
        %v1428 = vcvt.s32.f32 %v1420
        %v1429 = vcvt.s32.f32 %v1421
        %v1430 = vcvt.s32.f32 %v1422
        %v1431 = vcvt.s32.f32 %v1423
        %v1432 = vcvt.s32.f32 %v1424
        %v1433 = vcvt.s32.f32 %v1425
        %v1434 = vcvt.s32.f32 %v1426
        %v1435 = vcvt.s32.f32 %v1427
        %v1437 = vsel %vm393, %v1428, 0
        %v1440 = vsel %vm393, %v1429, 0
        %v1443 = vsel %vm393, %v1430, 0
        %v1446 = vsel %vm393, %v1431, 0
        %v1449 = vsel %vm393, %v1432, 0
        %v1452 = vsel %vm393, %v1433, 0
        %v1455 = vsel %vm393, %v1434, 0
        %v1458 = vsel %vm393, %v1435, 0
        %1460 = vmatprep.subr.mxu0 0.0
        %1461 = vmatpush1.msra.mxu0 %v607
        %1462 = vmatprep.subr.mxu0 0.0
        %1463 = vmatpush1.msra.mxu0 %v612
        %1464 = vmatprep.subr.mxu0 0.0
        %1465 = vmatpush1.msra.mxu0 %v617
        %1466 = vmatprep.subr.mxu0 0.0
        %1467 = vmatpush1.msra.mxu0 %v622
        %1468 = vmatprep.subr.mxu0 0.0
        %1469 = vmatpush1.msra.mxu0 %v627
        %1470 = vmatprep.subr.mxu0 0.0
        %1471 = vmatpush1.msra.mxu0 %v632
        %1472 = vmatprep.subr.mxu0 0.0
        %1473 = vmatpush1.msra.mxu0 %v637
        %1474 = vmatprep.subr.mxu0 0.0
        %1475 = vmatpush1.msra.mxu0 %v642
        %1476 = vmatprep.subr.mxu0 0.0
        %1477 = vmatpush1.msra.mxu0 0.0
        %1478 = vmatprep.subr.mxu0 0.0
        %1479 = vmatpush1.msra.mxu0 0.0
        %1480 = vmatprep.subr.mxu0 0.0
        %1481 = vmatpush1.msra.mxu0 0.0
        %1482 = vmatprep.subr.mxu0 0.0
        %1483 = vmatpush1.msra.mxu0 0.0
        %1484 = vmatprep.subr.mxu0 0.0
        %1485 = vmatpush1.msra.mxu0 0.0
        %1486 = vmatprep.subr.mxu0 0.0
        %1487 = vmatpush1.msra.mxu0 0.0
        %1488 = vmatprep.subr.mxu0 0.0
        %1489 = vmatpush1.msra.mxu0 0.0
        %1490 = vmatprep.subr.mxu0 0.0
        %1491 = vmatpush1.msra.mxu0 0.0
        %1492 = vmatprep.subr.mxu0 0.0
        %1493 = vmatpush1.msra.mxu0 0.0
        %1494 = vmatprep.subr.mxu0 0.0
        %1495 = vmatpush1.msra.mxu0 0.0
        %1496 = vmatprep.subr.mxu0 0.0
        %1497 = vmatpush1.msra.mxu0 0.0
        %1498 = vmatprep.subr.mxu0 0.0
        %1499 = vmatpush1.msra.mxu0 0.0
        %1500 = vmatprep.subr.mxu0 0.0
        %1501 = vmatpush1.msra.mxu0 0.0
        %1502 = vmatprep.subr.mxu0 0.0
        %1503 = vmatpush1.msra.mxu0 0.0
        %1504 = vmatprep.subr.mxu0 0.0
        %1505 = vmatpush1.msra.mxu0 0.0
        %1506 = vmatprep.subr.mxu0 0.0
        %1507 = vmatpush1.msra.mxu0 0.0
        %1508 = vmatprep.subr.mxu0 0.0
        %1509 = vmatpush1.msra.mxu0 0.0
        %1510 = vmatprep.subr.mxu0 0.0
        %1511 = vmatpush1.msra.mxu0 0.0
        %1512 = vmatprep.subr.mxu0 0.0
        %1513 = vmatpush1.msra.mxu0 0.0
        %1514 = vmatprep.subr.mxu0 0.0
        %1515 = vmatpush1.msra.mxu0 0.0
        %1516 = vmatprep.subr.mxu0 0.0
        %1517 = vmatpush1.msra.mxu0 0.0
        %1518 = vmatprep.subr.mxu0 0.0
        %1519 = vmatpush1.msra.mxu0 0.0
        %1520 = vmatprep.subr.mxu0 0.0
        %1521 = vmatpush1.msra.mxu0 0.0
        %1522 = vmatprep.subr.mxu0 0.0
        %1523 = vmatpush1.msra.mxu0 0.0
        %1524 = vmatprep.mubr.f32.mxu0 0.0
        %1525 = vmatmul.mubr.f32.gmra.mrb[0].mxu0 %v1437
        %v1526 = vpop.f32.mrb[0].mxu0
        %v1527 = vadd.f32 0.0, %v1526
        %v1528 = vpop.f32.mrb[0].mxu0
        %1529 = vmatprep.mubr.f32.mxu0 0.0
        %1530 = vmatmul.mubr.f32.gmra.mrb[0].mxu0 %v1440
        %v1531 = vpop.f32.mrb[0].mxu0
        %v1532 = vadd.f32 0.0, %v1531
        %v1533 = vpop.f32.mrb[0].mxu0
        %1534 = vmatprep.mubr.f32.mxu0 0.0
        %1535 = vmatmul.mubr.f32.gmra.mrb[0].mxu0 %v1443
        %v1536 = vpop.f32.mrb[0].mxu0
        %v1537 = vadd.f32 0.0, %v1536
        %v1538 = vpop.f32.mrb[0].mxu0
        %1539 = vmatprep.mubr.f32.mxu0 0.0
        %1540 = vmatmul.mubr.f32.gmra.mrb[0].mxu0 %v1446
        %v1541 = vpop.f32.mrb[0].mxu0
        %v1542 = vadd.f32 0.0, %v1541
        %v1543 = vpop.f32.mrb[0].mxu0
        %1544 = vmatprep.mubr.f32.mxu0 0.0
        %1545 = vmatmul.mubr.f32.gmra.mrb[0].mxu0 %v1449
        %v1546 = vpop.f32.mrb[0].mxu0
        %v1547 = vadd.f32 0.0, %v1546
        %v1548 = vpop.f32.mrb[0].mxu0
        %1549 = vmatprep.mubr.f32.mxu0 0.0
        %1550 = vmatmul.mubr.f32.gmra.mrb[0].mxu0 %v1452
        %v1551 = vpop.f32.mrb[0].mxu0
        %v1552 = vadd.f32 0.0, %v1551
        %v1553 = vpop.f32.mrb[0].mxu0
        %1554 = vmatprep.mubr.f32.mxu0 0.0
        %1555 = vmatmul.mubr.f32.gmra.mrb[0].mxu0 %v1455
        %v1556 = vpop.f32.mrb[0].mxu0
        %v1557 = vadd.f32 0.0, %v1556
        %v1558 = vpop.f32.mrb[0].mxu0
        %1559 = vmatprep.mubr.f32.mxu0 0.0
        %1560 = vmatmul.mubr.f32.gmra.mrb[0].mxu0 %v1458
        %v1561 = vpop.f32.mrb[0].mxu0
        %v1562 = vadd.f32 0.0, %v1561
        %v1563 = vpop.f32.mrb[0].mxu0
        %1564 = vdwg.mxu0
        %v1565 = vadd.f32 %v500, %v1527
        %v1566 = vadd.f32 %v505, %v1532
        %v1567 = vadd.f32 %v510, %v1537
        %v1568 = vadd.f32 %v515, %v1542
        %v1569 = vadd.f32 %v520, %v1547
        %v1570 = vadd.f32 %v525, %v1552
        %v1571 = vadd.f32 %v530, %v1557
        %v1572 = vadd.f32 %v535, %v1562
        %v1573 = vmul.f32 %v875, %v1565
        %v1574 = vmul.f32 %v875, %v1566
        %v1575 = vmul.f32 %v875, %v1567
        %v1576 = vmul.f32 %v875, %v1568
        %v1577 = vmul.f32 %v875, %v1569
        %v1578 = vmul.f32 %v875, %v1570
        %v1579 = vmul.f32 %v875, %v1571
        %v1580 = vmul.f32 %v875, %v1572
        %v1581 = vadd.f32 %v1573, %v889
        %v1582 = vadd.f32 %v1574, %v889
        %v1583 = vadd.f32 %v1575, %v889
        %v1584 = vadd.f32 %v1576, %v889
        %v1585 = vadd.f32 %v1577, %v889
        %v1586 = vadd.f32 %v1578, %v889
        %v1587 = vadd.f32 %v1579, %v889
        %v1588 = vadd.f32 %v1580, %v889
        %v1589 = vmax.f32 %v1581, 0.0
        %v1590 = vmax.f32 %v1582, 0.0
        %v1591 = vmax.f32 %v1583, 0.0
        %v1592 = vmax.f32 %v1584, 0.0
        %v1593 = vmax.f32 %v1585, 0.0
        %v1594 = vmax.f32 %v1586, 0.0
        %v1595 = vmax.f32 %v1587, 0.0
        %v1596 = vmax.f32 %v1588, 0.0
        %v1597 = vmax.f32 %v1252, %v1589
        %v1598 = vmax.f32 %v1253, %v1590
        %v1599 = vmax.f32 %v1254, %v1591
        %v1600 = vmax.f32 %v1255, %v1592
        %v1601 = vmax.f32 %v1256, %v1593
        %v1602 = vmax.f32 %v1257, %v1594
        %v1603 = vmax.f32 %v1258, %v1595
        %v1604 = vmax.f32 %v1259, %v1596
        %v1605 = vsel %vm1412, 1e+30, %v1340
        %v1606 = vsel %vm1413, 1e+30, %v1341
        %v1607 = vsel %vm1414, 1e+30, %v1342
        %v1608 = vsel %vm1415, 1e+30, %v1343
        %v1609 = vsel %vm1416, 1e+30, %v1344
        %v1610 = vsel %vm1417, 1e+30, %v1345
        %v1611 = vsel %vm1418, 1e+30, %v1346
        %v1612 = vsel %vm1419, 1e+30, %v1347
        %v1613 = vsel %vm393, %v1605, inf
        %1614 = vmin.xlane.f32.xlu0 %v1613
        %v1615 = vpop.xlane.xlu0 %1614
        %v1616 = vsel %vm393, %v1606, inf
        %1617 = vmin.xlane.f32.xlu0 %v1616
        %v1618 = vpop.xlane.xlu0 %1617
        %v1619 = vsel %vm393, %v1607, inf
        %1620 = vmin.xlane.f32.xlu0 %v1619
        %v1621 = vpop.xlane.xlu0 %1620
        %v1622 = vsel %vm393, %v1608, inf
        %1623 = vmin.xlane.f32.xlu0 %v1622
        %v1624 = vpop.xlane.xlu0 %1623
        %v1625 = vsel %vm393, %v1609, inf
        %1626 = vmin.xlane.f32.xlu0 %v1625
        %v1627 = vpop.xlane.xlu0 %1626
        %v1628 = vsel %vm393, %v1610, inf
        %1629 = vmin.xlane.f32.xlu0 %v1628
        %v1630 = vpop.xlane.xlu0 %1629
        %v1631 = vsel %vm393, %v1611, inf
        %1632 = vmin.xlane.f32.xlu0 %v1631
        %v1633 = vpop.xlane.xlu0 %1632
        %v1634 = vsel %vm393, %v1612, inf
        %1635 = vmin.xlane.f32.xlu0 %v1634
        %v1636 = vpop.xlane.xlu0 %1635
        %vm1637 = vcmp.le.f32.partialorder %v1605, %v1615
        %vm1638 = vcmp.le.f32.partialorder %v1606, %v1618
        %vm1639 = vcmp.le.f32.partialorder %v1607, %v1621
        %vm1640 = vcmp.le.f32.partialorder %v1608, %v1624
        %vm1641 = vcmp.le.f32.partialorder %v1609, %v1627
        %vm1642 = vcmp.le.f32.partialorder %v1610, %v1630
        %vm1643 = vcmp.le.f32.partialorder %v1611, %v1633
        %vm1644 = vcmp.le.f32.partialorder %v1612, %v1636
        %v1645 = vsel %vm1637, %v645, 1e+30
        %v1646 = vsel %vm1638, %v645, 1e+30
        %v1647 = vsel %vm1639, %v645, 1e+30
        %v1648 = vsel %vm1640, %v645, 1e+30
        %v1649 = vsel %vm1641, %v645, 1e+30
        %v1650 = vsel %vm1642, %v645, 1e+30
        %v1651 = vsel %vm1643, %v645, 1e+30
        %v1652 = vsel %vm1644, %v645, 1e+30
        %v1653 = vsel %vm393, %v1645, inf
        %1654 = vmin.xlane.f32.xlu0 %v1653
        %v1655 = vpop.xlane.xlu0 %1654
        %v1656 = vsel %vm393, %v1646, inf
        %1657 = vmin.xlane.f32.xlu0 %v1656
        %v1658 = vpop.xlane.xlu0 %1657
        %v1659 = vsel %vm393, %v1647, inf
        %1660 = vmin.xlane.f32.xlu0 %v1659
        %v1661 = vpop.xlane.xlu0 %1660
        %v1662 = vsel %vm393, %v1648, inf
        %1663 = vmin.xlane.f32.xlu0 %v1662
        %v1664 = vpop.xlane.xlu0 %1663
        %v1665 = vsel %vm393, %v1649, inf
        %1666 = vmin.xlane.f32.xlu0 %v1665
        %v1667 = vpop.xlane.xlu0 %1666
        %v1668 = vsel %vm393, %v1650, inf
        %1669 = vmin.xlane.f32.xlu0 %v1668
        %v1670 = vpop.xlane.xlu0 %1669
        %v1671 = vsel %vm393, %v1651, inf
        %1672 = vmin.xlane.f32.xlu0 %v1671
        %v1673 = vpop.xlane.xlu0 %1672
        %v1674 = vsel %vm393, %v1652, inf
        %1675 = vmin.xlane.f32.xlu0 %v1674
        %v1676 = vpop.xlane.xlu0 %1675
        %vm1677 = vcmp.eq.f32.partialorder %v645, %v1655
        %vm1678 = vcmp.eq.f32.partialorder %v645, %v1658
        %vm1679 = vcmp.eq.f32.partialorder %v645, %v1661
        %vm1680 = vcmp.eq.f32.partialorder %v645, %v1664
        %vm1681 = vcmp.eq.f32.partialorder %v645, %v1667
        %vm1682 = vcmp.eq.f32.partialorder %v645, %v1670
        %vm1683 = vcmp.eq.f32.partialorder %v645, %v1673
        %vm1684 = vcmp.eq.f32.partialorder %v645, %v1676
        %v1685 = vsel %vm1677, 1e+30, %v1605
        %v1686 = vsel %vm1678, 1e+30, %v1606
        %v1687 = vsel %vm1679, 1e+30, %v1607
        %v1688 = vsel %vm1680, 1e+30, %v1608
        %v1689 = vsel %vm1681, 1e+30, %v1609
        %v1690 = vsel %vm1682, 1e+30, %v1610
        %v1691 = vsel %vm1683, 1e+30, %v1611
        %v1692 = vsel %vm1684, 1e+30, %v1612
        %v1693 = vsel %vm393, %v1685, inf
        %1694 = vmin.xlane.f32.xlu0 %v1693
        %v1695 = vpop.xlane.xlu0 %1694
        %v1696 = vsel %vm393, %v1686, inf
        %1697 = vmin.xlane.f32.xlu0 %v1696
        %v1698 = vpop.xlane.xlu0 %1697
        %v1699 = vsel %vm393, %v1687, inf
        %1700 = vmin.xlane.f32.xlu0 %v1699
        %v1701 = vpop.xlane.xlu0 %1700
        %v1702 = vsel %vm393, %v1688, inf
        %1703 = vmin.xlane.f32.xlu0 %v1702
        %v1704 = vpop.xlane.xlu0 %1703
        %v1705 = vsel %vm393, %v1689, inf
        %1706 = vmin.xlane.f32.xlu0 %v1705
        %v1707 = vpop.xlane.xlu0 %1706
        %v1708 = vsel %vm393, %v1690, inf
        %1709 = vmin.xlane.f32.xlu0 %v1708
        %v1710 = vpop.xlane.xlu0 %1709
        %v1711 = vsel %vm393, %v1691, inf
        %1712 = vmin.xlane.f32.xlu0 %v1711
        %v1713 = vpop.xlane.xlu0 %1712
        %v1714 = vsel %vm393, %v1692, inf
        %1715 = vmin.xlane.f32.xlu0 %v1714
        %v1716 = vpop.xlane.xlu0 %1715
        %vm1717 = vcmp.le.f32.partialorder %v1685, %v1695
        %vm1718 = vcmp.le.f32.partialorder %v1686, %v1698
        %vm1719 = vcmp.le.f32.partialorder %v1687, %v1701
        %vm1720 = vcmp.le.f32.partialorder %v1688, %v1704
        %vm1721 = vcmp.le.f32.partialorder %v1689, %v1707
        %vm1722 = vcmp.le.f32.partialorder %v1690, %v1710
        %vm1723 = vcmp.le.f32.partialorder %v1691, %v1713
        %vm1724 = vcmp.le.f32.partialorder %v1692, %v1716
        %v1725 = vsel %vm1717, %v645, 1e+30
        %v1726 = vsel %vm1718, %v645, 1e+30
        %v1727 = vsel %vm1719, %v645, 1e+30
        %v1728 = vsel %vm1720, %v645, 1e+30
        %v1729 = vsel %vm1721, %v645, 1e+30
        %v1730 = vsel %vm1722, %v645, 1e+30
        %v1731 = vsel %vm1723, %v645, 1e+30
        %v1732 = vsel %vm1724, %v645, 1e+30
        %v1733 = vsel %vm393, %v1725, inf
        %1734 = vmin.xlane.f32.xlu0 %v1733
        %v1735 = vpop.xlane.xlu0 %1734
        %v1736 = vsel %vm393, %v1726, inf
        %1737 = vmin.xlane.f32.xlu0 %v1736
        %v1738 = vpop.xlane.xlu0 %1737
        %v1739 = vsel %vm393, %v1727, inf
        %1740 = vmin.xlane.f32.xlu0 %v1739
        %v1741 = vpop.xlane.xlu0 %1740
        %v1742 = vsel %vm393, %v1728, inf
        %1743 = vmin.xlane.f32.xlu0 %v1742
        %v1744 = vpop.xlane.xlu0 %1743
        %v1745 = vsel %vm393, %v1729, inf
        %1746 = vmin.xlane.f32.xlu0 %v1745
        %v1747 = vpop.xlane.xlu0 %1746
        %v1748 = vsel %vm393, %v1730, inf
        %1749 = vmin.xlane.f32.xlu0 %v1748
        %v1750 = vpop.xlane.xlu0 %1749
        %v1751 = vsel %vm393, %v1731, inf
        %1752 = vmin.xlane.f32.xlu0 %v1751
        %v1753 = vpop.xlane.xlu0 %1752
        %v1754 = vsel %vm393, %v1732, inf
        %1755 = vmin.xlane.f32.xlu0 %v1754
        %v1756 = vpop.xlane.xlu0 %1755
        %vm1757 = vcmp.eq.f32.partialorder %v645, %v1735
        %vm1758 = vcmp.eq.f32.partialorder %v645, %v1738
        %vm1759 = vcmp.eq.f32.partialorder %v645, %v1741
        %vm1760 = vcmp.eq.f32.partialorder %v645, %v1744
        %vm1761 = vcmp.eq.f32.partialorder %v645, %v1747
        %vm1762 = vcmp.eq.f32.partialorder %v645, %v1750
        %vm1763 = vcmp.eq.f32.partialorder %v645, %v1753
        %vm1764 = vcmp.eq.f32.partialorder %v645, %v1756
        %v1765 = vsel %vm1757, 1, 0
        %v1766 = vsel %vm1758, 1, 0
        %v1767 = vsel %vm1759, 1, 0
        %v1768 = vsel %vm1760, 1, 0
        %v1769 = vsel %vm1761, 1, 0
        %v1770 = vsel %vm1762, 1, 0
        %v1771 = vsel %vm1763, 1, 0
        %v1772 = vsel %vm1764, 1, 0
        %v1773 = vcvt.s32.f32 %v1765
        %v1774 = vcvt.s32.f32 %v1766
        %v1775 = vcvt.s32.f32 %v1767
        %v1776 = vcvt.s32.f32 %v1768
        %v1777 = vcvt.s32.f32 %v1769
        %v1778 = vcvt.s32.f32 %v1770
        %v1779 = vcvt.s32.f32 %v1771
        %v1780 = vcvt.s32.f32 %v1772
        %v1782 = vsel %vm393, %v1773, 0
        %v1785 = vsel %vm393, %v1774, 0
        %v1788 = vsel %vm393, %v1775, 0
        %v1791 = vsel %vm393, %v1776, 0
        %v1794 = vsel %vm393, %v1777, 0
        %v1797 = vsel %vm393, %v1778, 0
        %v1800 = vsel %vm393, %v1779, 0
        %v1803 = vsel %vm393, %v1780, 0
        %1805 = vmatprep.subr.mxu0 0.0
        %1806 = vmatpush1.msra.mxu0 %v607
        %1807 = vmatprep.subr.mxu0 0.0
        %1808 = vmatpush1.msra.mxu0 %v612
        %1809 = vmatprep.subr.mxu0 0.0
        %1810 = vmatpush1.msra.mxu0 %v617
        %1811 = vmatprep.subr.mxu0 0.0
        %1812 = vmatpush1.msra.mxu0 %v622
        %1813 = vmatprep.subr.mxu0 0.0
        %1814 = vmatpush1.msra.mxu0 %v627
        %1815 = vmatprep.subr.mxu0 0.0
        %1816 = vmatpush1.msra.mxu0 %v632
        %1817 = vmatprep.subr.mxu0 0.0
        %1818 = vmatpush1.msra.mxu0 %v637
        %1819 = vmatprep.subr.mxu0 0.0
        %1820 = vmatpush1.msra.mxu0 %v642
        %1821 = vmatprep.subr.mxu0 0.0
        %1822 = vmatpush1.msra.mxu0 0.0
        %1823 = vmatprep.subr.mxu0 0.0
        %1824 = vmatpush1.msra.mxu0 0.0
        %1825 = vmatprep.subr.mxu0 0.0
        %1826 = vmatpush1.msra.mxu0 0.0
        %1827 = vmatprep.subr.mxu0 0.0
        %1828 = vmatpush1.msra.mxu0 0.0
        %1829 = vmatprep.subr.mxu0 0.0
        %1830 = vmatpush1.msra.mxu0 0.0
        %1831 = vmatprep.subr.mxu0 0.0
        %1832 = vmatpush1.msra.mxu0 0.0
        %1833 = vmatprep.subr.mxu0 0.0
        %1834 = vmatpush1.msra.mxu0 0.0
        %1835 = vmatprep.subr.mxu0 0.0
        %1836 = vmatpush1.msra.mxu0 0.0
        %1837 = vmatprep.subr.mxu0 0.0
        %1838 = vmatpush1.msra.mxu0 0.0
        %1839 = vmatprep.subr.mxu0 0.0
        %1840 = vmatpush1.msra.mxu0 0.0
        %1841 = vmatprep.subr.mxu0 0.0
        %1842 = vmatpush1.msra.mxu0 0.0
        %1843 = vmatprep.subr.mxu0 0.0
        %1844 = vmatpush1.msra.mxu0 0.0
        %1845 = vmatprep.subr.mxu0 0.0
        %1846 = vmatpush1.msra.mxu0 0.0
        %1847 = vmatprep.subr.mxu0 0.0
        %1848 = vmatpush1.msra.mxu0 0.0
        %1849 = vmatprep.subr.mxu0 0.0
        %1850 = vmatpush1.msra.mxu0 0.0
        %1851 = vmatprep.subr.mxu0 0.0
        %1852 = vmatpush1.msra.mxu0 0.0
        %1853 = vmatprep.subr.mxu0 0.0
        %1854 = vmatpush1.msra.mxu0 0.0
        %1855 = vmatprep.subr.mxu0 0.0
        %1856 = vmatpush1.msra.mxu0 0.0
        %1857 = vmatprep.subr.mxu0 0.0
        %1858 = vmatpush1.msra.mxu0 0.0
        %1859 = vmatprep.subr.mxu0 0.0
        %1860 = vmatpush1.msra.mxu0 0.0
        %1861 = vmatprep.subr.mxu0 0.0
        %1862 = vmatpush1.msra.mxu0 0.0
        %1863 = vmatprep.subr.mxu0 0.0
        %1864 = vmatpush1.msra.mxu0 0.0
        %1865 = vmatprep.subr.mxu0 0.0
        %1866 = vmatpush1.msra.mxu0 0.0
        %1867 = vmatprep.subr.mxu0 0.0
        %1868 = vmatpush1.msra.mxu0 0.0
        %1869 = vmatprep.mubr.f32.mxu0 0.0
        %1870 = vmatmul.mubr.f32.gmra.mrb[0].mxu0 %v1782
        %v1871 = vpop.f32.mrb[0].mxu0
        %v1872 = vadd.f32 0.0, %v1871
        %v1873 = vpop.f32.mrb[0].mxu0
        %1874 = vmatprep.mubr.f32.mxu0 0.0
        %1875 = vmatmul.mubr.f32.gmra.mrb[0].mxu0 %v1785
        %v1876 = vpop.f32.mrb[0].mxu0
        %v1877 = vadd.f32 0.0, %v1876
        %v1878 = vpop.f32.mrb[0].mxu0
        %1879 = vmatprep.mubr.f32.mxu0 0.0
        %1880 = vmatmul.mubr.f32.gmra.mrb[0].mxu0 %v1788
        %v1881 = vpop.f32.mrb[0].mxu0
        %v1882 = vadd.f32 0.0, %v1881
        %v1883 = vpop.f32.mrb[0].mxu0
        %1884 = vmatprep.mubr.f32.mxu0 0.0
        %1885 = vmatmul.mubr.f32.gmra.mrb[0].mxu0 %v1791
        %v1886 = vpop.f32.mrb[0].mxu0
        %v1887 = vadd.f32 0.0, %v1886
        %v1888 = vpop.f32.mrb[0].mxu0
        %1889 = vmatprep.mubr.f32.mxu0 0.0
        %1890 = vmatmul.mubr.f32.gmra.mrb[0].mxu0 %v1794
        %v1891 = vpop.f32.mrb[0].mxu0
        %v1892 = vadd.f32 0.0, %v1891
        %v1893 = vpop.f32.mrb[0].mxu0
        %1894 = vmatprep.mubr.f32.mxu0 0.0
        %1895 = vmatmul.mubr.f32.gmra.mrb[0].mxu0 %v1797
        %v1896 = vpop.f32.mrb[0].mxu0
        %v1897 = vadd.f32 0.0, %v1896
        %v1898 = vpop.f32.mrb[0].mxu0
        %1899 = vmatprep.mubr.f32.mxu0 0.0
        %1900 = vmatmul.mubr.f32.gmra.mrb[0].mxu0 %v1800
        %v1901 = vpop.f32.mrb[0].mxu0
        %v1902 = vadd.f32 0.0, %v1901
        %v1903 = vpop.f32.mrb[0].mxu0
        %1904 = vmatprep.mubr.f32.mxu0 0.0
        %1905 = vmatmul.mubr.f32.gmra.mrb[0].mxu0 %v1803
        %v1906 = vpop.f32.mrb[0].mxu0
        %v1907 = vadd.f32 0.0, %v1906
        %v1908 = vpop.f32.mrb[0].mxu0
        %1909 = vdwg.mxu0
        %v1910 = vadd.f32 %v500, %v1872
        %v1911 = vadd.f32 %v505, %v1877
        %v1912 = vadd.f32 %v510, %v1882
        %v1913 = vadd.f32 %v515, %v1887
        %v1914 = vadd.f32 %v520, %v1892
        %v1915 = vadd.f32 %v525, %v1897
        %v1916 = vadd.f32 %v530, %v1902
        %v1917 = vadd.f32 %v535, %v1907
        %v1918 = vmul.f32 %v875, %v1910
        %v1919 = vmul.f32 %v875, %v1911
        %v1920 = vmul.f32 %v875, %v1912
        %v1921 = vmul.f32 %v875, %v1913
        %v1922 = vmul.f32 %v875, %v1914
        %v1923 = vmul.f32 %v875, %v1915
        %v1924 = vmul.f32 %v875, %v1916
        %v1925 = vmul.f32 %v875, %v1917
        %v1926 = vadd.f32 %v1918, %v889
        %v1927 = vadd.f32 %v1919, %v889
        %v1928 = vadd.f32 %v1920, %v889
        %v1929 = vadd.f32 %v1921, %v889
        %v1930 = vadd.f32 %v1922, %v889
        %v1931 = vadd.f32 %v1923, %v889
        %v1932 = vadd.f32 %v1924, %v889
        %v1933 = vadd.f32 %v1925, %v889
        %v1934 = vmax.f32 %v1926, 0.0
        %v1935 = vmax.f32 %v1927, 0.0
        %v1936 = vmax.f32 %v1928, 0.0
        %v1937 = vmax.f32 %v1929, 0.0
        %v1938 = vmax.f32 %v1930, 0.0
        %v1939 = vmax.f32 %v1931, 0.0
        %v1940 = vmax.f32 %v1932, 0.0
        %v1941 = vmax.f32 %v1933, 0.0
        %v1942 = vmax.f32 %v1597, %v1934
        %v1943 = vmax.f32 %v1598, %v1935
        %v1944 = vmax.f32 %v1599, %v1936
        %v1945 = vmax.f32 %v1600, %v1937
        %v1946 = vmax.f32 %v1601, %v1938
        %v1947 = vmax.f32 %v1602, %v1939
        %v1948 = vmax.f32 %v1603, %v1940
        %v1949 = vmax.f32 %v1604, %v1941
        %1950 = vst [vmem:[%s218] sm:$0xff] %v1942
        %1951 = vst [vmem:[%s218 + $0x8] sm:$0xff] %v1943
        %1952 = vst [vmem:[%s218 + $0x10] sm:$0xff] %v1944
        %1953 = vst [vmem:[%s218 + $0x18] sm:$0xff] %v1945
        %1954 = vst [vmem:[%s218 + $0x20] sm:$0xff] %v1946
        %1955 = vst [vmem:[%s218 + $0x28] sm:$0xff] %v1947
        %1956 = vst [vmem:[%s218 + $0x30] sm:$0xff] %v1948
        %1957 = vst [vmem:[%s218 + $0x38] sm:$0xff] %v1949
        %s1958 = sand.u32 %s137, 1
        %s1959 = scalar_lea.sflag [#allocation3], %s1958
        %s1960 = sand.u32 %s137, 1
        %s1961 = smul.addr %s1960, 64
        %s1962 = scalar_lea.vmem [#allocation2], %s1961
        // Predicated region
        $region41: #{tpu_custom_call.1} parent=39 // pred_check
          %p1963 = pneg %p147
        $region42: #{tpu_custom_call.1} parent=39 // pred_check_branch
          %1965 = sbr.rel (%p1963) target = $region44
        $region43: #{tpu_custom_call.1} parent=39 // pred_region
          %s1966 = smul.u32 8, %s19
          %s1968 = ssub.s32 1024, 1024
          %1969 = vsyncadd %s1959, %s1968
          %s1970 = smul.addr %s1966, 128
          %s1971 = scalar_lea.hbm %s5, %s1970
          %s1972 = sshll.u32 %s1962, 4
          %s1973 = int_to_ptr.vmem [resolvable:$true] %s1972
          %1978 = dma.vmem_to_hbm [thread:$0]  %s1973, 1024, %s1971, %s1959, 128, 128, 8
        $region44: #{tpu_custom_call.1} parent=39 // pred_fallthru
          _
      $region40: #{tpu_custom_call.1} parent=5 // pred_fallthru
        _
      %p1979 = scmp.le.s32.totalorder 2, %s14
      // Predicated region
      $region45: #{tpu_custom_call.1} parent=5 // pred_check
        %p1980 = pneg %p1979
      $region46: #{tpu_custom_call.1} parent=5 // pred_check_branch
        %1982 = sbr.rel (%p1980) target = $region48
      $region47: #{tpu_custom_call.1} parent=5 // pred_region
        %s1983 = ssub.s32 %s14, 2
        // Predicated region
        $region49: #{tpu_custom_call.1} parent=47 // pred_check
          %p1984 = pneg %p153
        $region50: #{tpu_custom_call.1} parent=47 // pred_check_branch
          %1986 = sbr.rel (%p1984) target = $region52
        $region51: #{tpu_custom_call.1} parent=47 // pred_region
          %s1987 = sand.u32 %s138, 1
          %s1988 = scalar_lea.sflag [#allocation3], %s1987
          %s1989 = sand.u32 %s138, 1
          %s1990 = smul.addr %s1989, 64
          %s1991 = scalar_lea.vmem [#allocation2], %s1990
          %1992 = dma.done %s1988, 1024
        $region52: #{tpu_custom_call.1} parent=47 // pred_fallthru
          _
      $region48: #{tpu_custom_call.1} parent=5 // pred_fallthru
        _
    $region6: #{tpu_custom_call.1} parent=1 // loop_footer
      %s18 = sadd.s32 1, %s14
    $region7: #{tpu_custom_call.1} parent=1 // loop_footer_branch
      %13 = sbr.rel target = $region3
    $region8: #{tpu_custom_call.1} parent=1 // loop_exit
      _
    %1993 = vsyncpa [#allocation3], 1
    %s1994 = scalar_lea.sflag [#allocation3], 1
    %1995 = vsyncpa %s1994, 1

</llo_original>
